<compile_context>
chip_gen: v5e
topology: v5e:2x2
jax: 0.10.0
libtpu: 0.0.40
codegen_flags: <defaults>
</compile_context>

<pallas_src>
import math

import jax
import jax.numpy as jnp
from jax.experimental import pallas as pl
from jax.experimental.pallas import tpu as pltpu


def _round_up(x, m):
    return (x + m - 1) // m * m


# ---------------------------------------------------------------------------
# Fused Pallas kernel:  out = tanh( max_over_windows_j( W @ cols[j] ) + b )
# grid = (M tiles ["parallel"], n_windows ["arbitrary" reduction, innermost])
# ---------------------------------------------------------------------------
def _fused_matmul_kernel(x_ref, w_ref, b_ref, o_ref, acc_ref):
    j = pl.program_id(1)

    @pl.when(j == 0)
    def _init():
        acc_ref[...] = jnp.full_like(acc_ref, -jnp.inf)

    # MXU: bf16 inputs, f32 accumulate.
    s = jnp.dot(w_ref[...], x_ref[...], preferred_element_type=jnp.float32)
    acc_ref[...] = jnp.maximum(acc_ref[...], s)

    @pl.when(j == pl.num_programs(1) - 1)
    def _finalize():
        o_ref[...] = jnp.tanh(acc_ref[...] + b_ref[...])


def fused_matmul_pool_bias_tanh(cols, w, b, *, tm_max=512):
    """cols: (n_win, K, M) f32, w: (N, K) f32, b: (N,) f32 -> (N, M) f32.

    Computes tanh(max_j(w @ cols[j]) + b) with a lane-dense (N, M) output.
    n_win == 1 degenerates to a plain matmul+bias+tanh.
    """
    n_win, K, M = cols.shape
    N = w.shape[0]

    K_pad = _round_up(K, 16)                # bf16 sublane packing
    N_pad = _round_up(N, 8)                 # f32 sublane tile
    TM = min(tm_max, _round_up(M, 128))     # lane tile: multiple of 128
    M_pad = _round_up(M, TM)

    cols_p = jnp.pad(cols.astype(jnp.bfloat16),
                     ((0, 0), (0, K_pad - K), (0, M_pad - M)))
    w_p = jnp.pad(w.astype(jnp.bfloat16), ((0, N_pad - N), (0, K_pad - K)))
    b_p = jnp.pad(b.astype(jnp.float32), (0, N_pad - N)).reshape(N_pad, 1)

    out = pl.pallas_call(
        _fused_matmul_kernel,
        out_shape=jax.ShapeDtypeStruct((N_pad, M_pad), jnp.float32),
        grid=(M_pad // TM, n_win),
        in_specs=[
            pl.BlockSpec((None, K_pad, TM), lambda i, j: (j, 0, i)),
            pl.BlockSpec((N_pad, K_pad), lambda i, j: (0, 0)),
            pl.BlockSpec((N_pad, 1), lambda i, j: (0, 0)),
        ],
        out_specs=pl.BlockSpec((N_pad, TM), lambda i, j: (0, i)),
        scratch_shapes=[pltpu.VMEM((N_pad, TM), jnp.float32)],
        compiler_params=pltpu.CompilerParams(
            dimension_semantics=("parallel", "arbitrary"),
            vmem_limit_bytes=32 * 1024 * 1024,
        ),
    )(cols_p, w_p, b_p)
    return out[:N, :M]


# ---------------------------------------------------------------------------
# Plain-JAX glue: patch extraction and layout plumbing around the kernel.
# ---------------------------------------------------------------------------
def _im2col_patches(x, kh, kw):
    """x: (B, C, H, W) -> patches (B, Ho, Wo, C, kh, kw); flattening the last
    three dims matches PyTorch's weight.reshape(Cout, C*kh*kw) order."""
    B, C, H, W = x.shape
    Ho, Wo = H - kh + 1, W - kw + 1
    rows = []
    for i in range(kh):
        cols_i = [x[:, :, i:i + Ho, j:j + Wo] for j in range(kw)]
        rows.append(jnp.stack(cols_i, axis=-1))        # (B, C, Ho, Wo, kw)
    p = jnp.stack(rows, axis=-2)                       # (B, C, Ho, Wo, kh, kw)
    return p.transpose(0, 2, 3, 1, 4, 5), Ho, Wo       # (B, Ho, Wo, C, kh, kw)


def conv_pool_tanh(x, w, b):
    """maxpool2x2(tanh(conv(x)+b)) == tanh(maxpool2x2(conv(x))+b), NCHW."""
    Cout, Cin, kh, kw = w.shape
    B = x.shape[0]
    patches, Ho, Wo = _im2col_patches(x, kh, kw)
    assert Ho % 2 == 0 and Wo % 2 == 0
    Hp, Wp = Ho // 2, Wo // 2
    K = Cin * kh * kw
    M = B * Hp * Wp
    # (B, Hp, dy, Wp, dx, K) -> (dy, dx, B, Hp, Wp, K) -> (4, K, M):
    # the 4 pool-window offsets become the kernel's reduction grid axis.
    p = patches.reshape(B, Hp, 2, Wp, 2, K)
    cols = p.transpose(2, 4, 0, 1, 3, 5).reshape(4, M, K).transpose(0, 2, 1)
    y = fused_matmul_pool_bias_tanh(cols, w.reshape(Cout, K), b)   # (Cout, M)
    return y.reshape(Cout, B, Hp, Wp).transpose(1, 0, 2, 3)        # NCHW


def conv_tanh_feature_major(x, w, b):
    """tanh(conv(x)+b) returned feature-major as (Cout, B*Ho*Wo)."""
    Cout, Cin, kh, kw = w.shape
    B = x.shape[0]
    patches, Ho, Wo = _im2col_patches(x, kh, kw)
    K = Cin * kh * kw
    cols = patches.reshape(B * Ho * Wo, K).T[None]                  # (1, K, M)
    return fused_matmul_pool_bias_tanh(cols, w.reshape(Cout, K), b)


def linear_tanh_feature_major(x_fm, w, b):
    """x_fm: (in_f, B) -> tanh(w @ x_fm + b) as (out_f, B)."""
    return fused_matmul_pool_bias_tanh(x_fm[None], w, b)


# ---------------------------------------------------------------------------
# Deterministic parameter init (PyTorch default: U(-1/sqrt(fan_in), +))
# ---------------------------------------------------------------------------
def init_params(key):
    def conv_init(k, cout, cin, kh, kw):
        k1, k2 = jax.random.split(k)
        bound = 1.0 / math.sqrt(cin * kh * kw)
        w = jax.random.uniform(k1, (cout, cin, kh, kw), jnp.float32, -bound, bound)
        b = jax.random.uniform(k2, (cout,), jnp.float32, -bound, bound)
        return w, b

    def linear_init(k, out_f, in_f):
        k1, k2 = jax.random.split(k)
        bound = 1.0 / math.sqrt(in_f)
        w = jax.random.uniform(k1, (out_f, in_f), jnp.float32, -bound, bound)
        b = jax.random.uniform(k2, (out_f,), jnp.float32, -bound, bound)
        return w, b

    keys = jax.random.split(key, 5)
    return {
        "C1": conv_init(keys[0], 6, 1, 5, 5),
        "C3": conv_init(keys[1], 16, 6, 5, 5),
        "C5": conv_init(keys[2], 120, 16, 5, 5),
        "F6": linear_init(keys[3], 84, 120),
        "OL": linear_init(keys[4], 10, 84),
    }


def lenet5_forward(params, x):
    x = conv_pool_tanh(x, *params["C1"])              # (B, 6, 14, 14)
    x = conv_pool_tanh(x, *params["C3"])              # (B, 16, 5, 5)
    f = conv_tanh_feature_major(x, *params["C5"])     # (120, B)  == record['C5'].T
    f = linear_tanh_feature_major(f, *params["F6"])   # (84, B)   == record['F6'].T
    f = linear_tanh_feature_major(f, *params["OL"])   # (10, B)
    return f.T                                        # (B, 10)


if __name__ == "__main__":
    key = jax.random.PRNGKey(0)
    pkey, xkey = jax.random.split(key)
    params = init_params(pkey)
    # LeNet-5 requires 32x32 single-channel input so C5 yields 1x1 spatial.
    x = jax.random.normal(xkey, (2, 1, 32, 32), dtype=jnp.float32)
    fwd = jax.jit(lenet5_forward)
    out = jax.block_until_ready(fwd(params, x))
    assert out.shape == (2, 10) and out.dtype == jnp.float32
    print("KERNEL_OK")
</pallas_src>

<mosaic_0001>
module attributes {stable_mosaic.version = 11 : i64} {
  func.func @_fused_matmul_kernel(%arg0: i32, %arg1: i32, %arg2: memref<1x32x512xbf16, #tpu.memory_space<vmem>>, %arg3: memref<8x32xbf16, #tpu.memory_space<vmem>>, %arg4: memref<8x1xf32, #tpu.memory_space<vmem>>, %arg5: memref<8x512xf32, #tpu.memory_space<vmem>>, %arg6: memref<8x512xf32, #tpu.memory_space<vmem>>) attributes {dimension_semantics = [#tpu.dimension_semantics<parallel>, #tpu.dimension_semantics<arbitrary>], iteration_bounds = array<i64: 1, 4>, scalar_prefetch = 0 : i64, scratch_operands = 1 : i64, tpu.core_type = #tpu.core_type<tc>, window_params = [{transform_indices = @transform_0, window_bounds = array<i64: 1, 32, 512>}, {pipeline_mode = #tpu.pipeline_mode<synchronous>, transform_indices = @transform_1, window_bounds = array<i64: 8, 32>}, {pipeline_mode = #tpu.pipeline_mode<synchronous>, transform_indices = @transform_2, window_bounds = array<i64: 8, 1>}, {transform_indices = @transform_3, window_bounds = array<i64: 8, 512>}]} {
    %c0_i32 = arith.constant 0 : i32
    %0 = arith.cmpi eq, %arg1, %c0_i32 : i32
    %1 = arith.extui %0 : i1 to i32
    %c0_i32_0 = arith.constant 0 : i32
    %2 = arith.cmpi ne, %1, %c0_i32_0 : i32
    scf.if %2 {
      %cst_10 = arith.constant 0xFF800000 : f32
      %13 = vector.broadcast %cst_10 : f32 to vector<8x512xf32>
      %c0_11 = arith.constant 0 : index
      %c0_12 = arith.constant 0 : index
      %14 = vector.load %arg6[%c0_11, %c0_12] : memref<8x512xf32, #tpu.memory_space<vmem>>, vector<8x512xf32>
      tpu.vector_store %arg6[%c0_11, %c0_12], %13 {strides = array<i32>} : memref<8x512xf32, #tpu.memory_space<vmem>>, vector<8x512xf32>,
    } else {
    }
    %c0 = arith.constant 0 : index
    %c0_1 = arith.constant 0 : index
    %3 = vector.load %arg3[%c0, %c0_1] : memref<8x32xbf16, #tpu.memory_space<vmem>>, vector<8x32xbf16>
    %c0_2 = arith.constant 0 : index
    %c0_3 = arith.constant 0 : index
    %c0_4 = arith.constant 0 : index
    %4 = vector.load %arg2[%c0_2, %c0_3, %c0_4] : memref<1x32x512xbf16, #tpu.memory_space<vmem>>, vector<1x32x512xbf16>
    %5 = vector.shape_cast %4 : vector<1x32x512xbf16> to vector<32x512xbf16>
    %cst = arith.constant dense<0.000000e+00> : vector<8x512xf32>
    %6 = tpu.matmul %3, %5, %cst {dimension_numbers = #tpu.dot_dimension_numbers<[1], [0], [0], [1], [0, 0, 1, 1], [], []>} : vector<8x32xbf16>, vector<32x512xbf16>, vector<8x512xf32> -> vector<8x512xf32>
    %c0_5 = arith.constant 0 : index
    %c0_6 = arith.constant 0 : index
    %7 = vector.load %arg6[%c0_5, %c0_6] : memref<8x512xf32, #tpu.memory_space<vmem>>, vector<8x512xf32>
    %8 = arith.maximumf %7, %6 : vector<8x512xf32>
    %c0_7 = arith.constant 0 : index
    %c0_8 = arith.constant 0 : index
    %9 = vector.load %arg6[%c0_7, %c0_8] : memref<8x512xf32, #tpu.memory_space<vmem>>, vector<8x512xf32>
    tpu.vector_store %arg6[%c0_7, %c0_8], %8 {strides = array<i32>} : memref<8x512xf32, #tpu.memory_space<vmem>>, vector<8x512xf32>,
    %c3_i32 = arith.constant 3 : i32
    %10 = arith.cmpi eq, %arg1, %c3_i32 : i32
    %11 = arith.extui %10 : i1 to i32
    %c0_i32_9 = arith.constant 0 : i32
    %12 = arith.cmpi ne, %11, %c0_i32_9 : i32
    scf.if %12 {
      %c0_10 = arith.constant 0 : index
      %c0_11 = arith.constant 0 : index
      %13 = vector.load %arg6[%c0_10, %c0_11] : memref<8x512xf32, #tpu.memory_space<vmem>>, vector<8x512xf32>
      %c0_12 = arith.constant 0 : index
      %c0_13 = arith.constant 0 : index
      %14 = vector.load %arg4[%c0_12, %c0_13] : memref<8x1xf32, #tpu.memory_space<vmem>>, vector<8x1xf32>
      %15 = vector.broadcast %14 : vector<8x1xf32> to vector<8x512xf32>
      %16 = arith.addf %13, %15 : vector<8x512xf32>
      %17 = math.tanh %16 : vector<8x512xf32>
      %c0_14 = arith.constant 0 : index
      %c0_15 = arith.constant 0 : index
      %18 = vector.load %arg5[%c0_14, %c0_15] : memref<8x512xf32, #tpu.memory_space<vmem>>, vector<8x512xf32>
      tpu.vector_store %arg5[%c0_14, %c0_15], %17 {strides = array<i32>} : memref<8x512xf32, #tpu.memory_space<vmem>>, vector<8x512xf32>,
    } else {
    }
    return
  }
  func.func @transform_0(%arg0: i32, %arg1: i32) -> (i32, i32, i32) {
    %c0_i32 = arith.constant 0 : i32
    %c0_i32_0 = arith.constant 0 : i32
    return %arg1, %c0_i32, %arg0 : i32, i32, i32
  }
  func.func @transform_1(%arg0: i32, %arg1: i32) -> (i32, i32) {
    %c0_i32 = arith.constant 0 : i32
    %c0_i32_0 = arith.constant 0 : i32
    %c0_i32_1 = arith.constant 0 : i32
    return %c0_i32, %c0_i32_0 : i32, i32
  }
  func.func @transform_2(%arg0: i32, %arg1: i32) -> (i32, i32) {
    %c0_i32 = arith.constant 0 : i32
    %c0_i32_0 = arith.constant 0 : i32
    %c0_i32_1 = arith.constant 0 : i32
    return %c0_i32, %c0_i32_0 : i32, i32
  }
  func.func @transform_3(%arg0: i32, %arg1: i32) -> (i32, i32) {
    %c0_i32 = arith.constant 0 : i32
    %c0_i32_0 = arith.constant 0 : i32
    return %c0_i32, %arg0 : i32, i32
  }
}

module attributes {stable_mosaic.version = 11 : i64} {
  func.func @_fused_matmul_kernel(%arg0: i32, %arg1: i32, %arg2: memref<1x160x128xbf16, #tpu.memory_space<vmem>>, %arg3: memref<16x160xbf16, #tpu.memory_space<vmem>>, %arg4: memref<16x1xf32, #tpu.memory_space<vmem>>, %arg5: memref<16x128xf32, #tpu.memory_space<vmem>>, %arg6: memref<16x128xf32, #tpu.memory_space<vmem>>) attributes {dimension_semantics = [#tpu.dimension_semantics<parallel>, #tpu.dimension_semantics<arbitrary>], iteration_bounds = array<i64: 1, 4>, scalar_prefetch = 0 : i64, scratch_operands = 1 : i64, tpu.core_type = #tpu.core_type<tc>, window_params = [{transform_indices = @transform_0, window_bounds = array<i64: 1, 160, 128>}, {pipeline_mode = #tpu.pipeline_mode<synchronous>, transform_indices = @transform_1, window_bounds = array<i64: 16, 160>}, {pipeline_mode = #tpu.pipeline_mode<synchronous>, transform_indices = @transform_2, window_bounds = array<i64: 16, 1>}, {transform_indices = @transform_3, window_bounds = array<i64: 16, 128>}]} {
    %c0_i32 = arith.constant 0 : i32
    %0 = arith.cmpi eq, %arg1, %c0_i32 : i32
    %1 = arith.extui %0 : i1 to i32
    %c0_i32_0 = arith.constant 0 : i32
    %2 = arith.cmpi ne, %1, %c0_i32_0 : i32
    scf.if %2 {
      %cst_10 = arith.constant 0xFF800000 : f32
      %13 = vector.broadcast %cst_10 : f32 to vector<16x128xf32>
      %c0_11 = arith.constant 0 : index
      %c0_12 = arith.constant 0 : index
      %14 = vector.load %arg6[%c0_11, %c0_12] : memref<16x128xf32, #tpu.memory_space<vmem>>, vector<16x128xf32>
      tpu.vector_store %arg6[%c0_11, %c0_12], %13 {strides = array<i32>} : memref<16x128xf32, #tpu.memory_space<vmem>>, vector<16x128xf32>,
    } else {
    }
    %c0 = arith.constant 0 : index
    %c0_1 = arith.constant 0 : index
    %3 = vector.load %arg3[%c0, %c0_1] : memref<16x160xbf16, #tpu.memory_space<vmem>>, vector<16x160xbf16>
    %c0_2 = arith.constant 0 : index
    %c0_3 = arith.constant 0 : index
    %c0_4 = arith.constant 0 : index
    %4 = vector.load %arg2[%c0_2, %c0_3, %c0_4] : memref<1x160x128xbf16, #tpu.memory_space<vmem>>, vector<1x160x128xbf16>
    %5 = vector.shape_cast %4 : vector<1x160x128xbf16> to vector<160x128xbf16>
    %cst = arith.constant dense<0.000000e+00> : vector<16x128xf32>
    %6 = tpu.matmul %3, %5, %cst {dimension_numbers = #tpu.dot_dimension_numbers<[1], [0], [0], [1], [0, 0, 1, 1], [], []>} : vector<16x160xbf16>, vector<160x128xbf16>, vector<16x128xf32> -> vector<16x128xf32>
    %c0_5 = arith.constant 0 : index
    %c0_6 = arith.constant 0 : index
    %7 = vector.load %arg6[%c0_5, %c0_6] : memref<16x128xf32, #tpu.memory_space<vmem>>, vector<16x128xf32>
    %8 = arith.maximumf %7, %6 : vector<16x128xf32>
    %c0_7 = arith.constant 0 : index
    %c0_8 = arith.constant 0 : index
    %9 = vector.load %arg6[%c0_7, %c0_8] : memref<16x128xf32, #tpu.memory_space<vmem>>, vector<16x128xf32>
    tpu.vector_store %arg6[%c0_7, %c0_8], %8 {strides = array<i32>} : memref<16x128xf32, #tpu.memory_space<vmem>>, vector<16x128xf32>,
    %c3_i32 = arith.constant 3 : i32
    %10 = arith.cmpi eq, %arg1, %c3_i32 : i32
    %11 = arith.extui %10 : i1 to i32
    %c0_i32_9 = arith.constant 0 : i32
    %12 = arith.cmpi ne, %11, %c0_i32_9 : i32
    scf.if %12 {
      %c0_10 = arith.constant 0 : index
      %c0_11 = arith.constant 0 : index
      %13 = vector.load %arg6[%c0_10, %c0_11] : memref<16x128xf32, #tpu.memory_space<vmem>>, vector<16x128xf32>
      %c0_12 = arith.constant 0 : index
      %c0_13 = arith.constant 0 : index
      %14 = vector.load %arg4[%c0_12, %c0_13] : memref<16x1xf32, #tpu.memory_space<vmem>>, vector<16x1xf32>
      %15 = vector.broadcast %14 : vector<16x1xf32> to vector<16x128xf32>
      %16 = arith.addf %13, %15 : vector<16x128xf32>
      %17 = math.tanh %16 : vector<16x128xf32>
      %c0_14 = arith.constant 0 : index
      %c0_15 = arith.constant 0 : index
      %18 = vector.load %arg5[%c0_14, %c0_15] : memref<16x128xf32, #tpu.memory_space<vmem>>, vector<16x128xf32>
      tpu.vector_store %arg5[%c0_14, %c0_15], %17 {strides = array<i32>} : memref<16x128xf32, #tpu.memory_space<vmem>>, vector<16x128xf32>,
    } else {
    }
    return
  }
  func.func @transform_0(%arg0: i32, %arg1: i32) -> (i32, i32, i32) {
    %c0_i32 = arith.constant 0 : i32
    %c0_i32_0 = arith.constant 0 : i32
    return %arg1, %c0_i32, %arg0 : i32, i32, i32
  }
  func.func @transform_1(%arg0: i32, %arg1: i32) -> (i32, i32) {
    %c0_i32 = arith.constant 0 : i32
    %c0_i32_0 = arith.constant 0 : i32
    %c0_i32_1 = arith.constant 0 : i32
    return %c0_i32, %c0_i32_0 : i32, i32
  }
  func.func @transform_2(%arg0: i32, %arg1: i32) -> (i32, i32) {
    %c0_i32 = arith.constant 0 : i32
    %c0_i32_0 = arith.constant 0 : i32
    %c0_i32_1 = arith.constant 0 : i32
    return %c0_i32, %c0_i32_0 : i32, i32
  }
  func.func @transform_3(%arg0: i32, %arg1: i32) -> (i32, i32) {
    %c0_i32 = arith.constant 0 : i32
    %c0_i32_0 = arith.constant 0 : i32
    return %c0_i32, %arg0 : i32, i32
  }
}

module attributes {stable_mosaic.version = 11 : i64} {
  func.func @_fused_matmul_kernel(%arg0: i32, %arg1: i32, %arg2: memref<1x400x128xbf16, #tpu.memory_space<vmem>>, %arg3: memref<120x400xbf16, #tpu.memory_space<vmem>>, %arg4: memref<120x1xf32, #tpu.memory_space<vmem>>, %arg5: memref<120x128xf32, #tpu.memory_space<vmem>>, %arg6: memref<120x128xf32, #tpu.memory_space<vmem>>) attributes {dimension_semantics = [#tpu.dimension_semantics<parallel>, #tpu.dimension_semantics<arbitrary>], iteration_bounds = array<i64: 1, 1>, scalar_prefetch = 0 : i64, scratch_operands = 1 : i64, tpu.core_type = #tpu.core_type<tc>, window_params = [{transform_indices = @transform_0, window_bounds = array<i64: 1, 400, 128>}, {pipeline_mode = #tpu.pipeline_mode<synchronous>, transform_indices = @transform_1, window_bounds = array<i64: 120, 400>}, {pipeline_mode = #tpu.pipeline_mode<synchronous>, transform_indices = @transform_2, window_bounds = array<i64: 120, 1>}, {transform_indices = @transform_3, window_bounds = array<i64: 120, 128>}]} {
    %c0_i32 = arith.constant 0 : i32
    %0 = arith.cmpi eq, %arg1, %c0_i32 : i32
    %1 = arith.extui %0 : i1 to i32
    %c0_i32_0 = arith.constant 0 : i32
    %2 = arith.cmpi ne, %1, %c0_i32_0 : i32
    scf.if %2 {
      %cst_11 = arith.constant 0xFF800000 : f32
      %13 = vector.broadcast %cst_11 : f32 to vector<120x128xf32>
      %c0_12 = arith.constant 0 : index
      %c0_13 = arith.constant 0 : index
      %14 = vector.load %arg6[%c0_12, %c0_13] : memref<120x128xf32, #tpu.memory_space<vmem>>, vector<120x128xf32>
      tpu.vector_store %arg6[%c0_12, %c0_13], %13 {strides = array<i32>} : memref<120x128xf32, #tpu.memory_space<vmem>>, vector<120x128xf32>,
    } else {
    }
    %c0 = arith.constant 0 : index
    %c0_1 = arith.constant 0 : index
    %3 = vector.load %arg3[%c0, %c0_1] : memref<120x400xbf16, #tpu.memory_space<vmem>>, vector<120x400xbf16>
    %c0_2 = arith.constant 0 : index
    %c0_3 = arith.constant 0 : index
    %c0_4 = arith.constant 0 : index
    %4 = vector.load %arg2[%c0_2, %c0_3, %c0_4] : memref<1x400x128xbf16, #tpu.memory_space<vmem>>, vector<1x400x128xbf16>
    %5 = vector.shape_cast %4 : vector<1x400x128xbf16> to vector<400x128xbf16>
    %cst = arith.constant dense<0.000000e+00> : vector<120x128xf32>
    %6 = tpu.matmul %3, %5, %cst {dimension_numbers = #tpu.dot_dimension_numbers<[1], [0], [0], [1], [0, 0, 1, 1], [], []>} : vector<120x400xbf16>, vector<400x128xbf16>, vector<120x128xf32> -> vector<120x128xf32>
    %c0_5 = arith.constant 0 : index
    %c0_6 = arith.constant 0 : index
    %7 = vector.load %arg6[%c0_5, %c0_6] : memref<120x128xf32, #tpu.memory_space<vmem>>, vector<120x128xf32>
    %8 = arith.maximumf %7, %6 : vector<120x128xf32>
    %c0_7 = arith.constant 0 : index
    %c0_8 = arith.constant 0 : index
    %9 = vector.load %arg6[%c0_7, %c0_8] : memref<120x128xf32, #tpu.memory_space<vmem>>, vector<120x128xf32>
    tpu.vector_store %arg6[%c0_7, %c0_8], %8 {strides = array<i32>} : memref<120x128xf32, #tpu.memory_space<vmem>>, vector<120x128xf32>,
    %c0_i32_9 = arith.constant 0 : i32
    %10 = arith.cmpi eq, %arg1, %c0_i32_9 : i32
    %11 = arith.extui %10 : i1 to i32
    %c0_i32_10 = arith.constant 0 : i32
    %12 = arith.cmpi ne, %11, %c0_i32_10 : i32
    scf.if %12 {
      %c0_11 = arith.constant 0 : index
      %c0_12 = arith.constant 0 : index
      %13 = vector.load %arg6[%c0_11, %c0_12] : memref<120x128xf32, #tpu.memory_space<vmem>>, vector<120x128xf32>
      %c0_13 = arith.constant 0 : index
      %c0_14 = arith.constant 0 : index
      %14 = vector.load %arg4[%c0_13, %c0_14] : memref<120x1xf32, #tpu.memory_space<vmem>>, vector<120x1xf32>
      %15 = vector.broadcast %14 : vector<120x1xf32> to vector<120x128xf32>
      %16 = arith.addf %13, %15 : vector<120x128xf32>
      %17 = math.tanh %16 : vector<120x128xf32>
      %c0_15 = arith.constant 0 : index
      %c0_16 = arith.constant 0 : index
      %18 = vector.load %arg5[%c0_15, %c0_16] : memref<120x128xf32, #tpu.memory_space<vmem>>, vector<120x128xf32>
      tpu.vector_store %arg5[%c0_15, %c0_16], %17 {strides = array<i32>} : memref<120x128xf32, #tpu.memory_space<vmem>>, vector<120x128xf32>,
    } else {
    }
    return
  }
  func.func @transform_0(%arg0: i32, %arg1: i32) -> (i32, i32, i32) {
    %c0_i32 = arith.constant 0 : i32
    %c0_i32_0 = arith.constant 0 : i32
    return %arg1, %c0_i32, %arg0 : i32, i32, i32
  }
  func.func @transform_1(%arg0: i32, %arg1: i32) -> (i32, i32) {
    %c0_i32 = arith.constant 0 : i32
    %c0_i32_0 = arith.constant 0 : i32
    %c0_i32_1 = arith.constant 0 : i32
    return %c0_i32, %c0_i32_0 : i32, i32
  }
  func.func @transform_2(%arg0: i32, %arg1: i32) -> (i32, i32) {
    %c0_i32 = arith.constant 0 : i32
    %c0_i32_0 = arith.constant 0 : i32
    %c0_i32_1 = arith.constant 0 : i32
    return %c0_i32, %c0_i32_0 : i32, i32
  }
  func.func @transform_3(%arg0: i32, %arg1: i32) -> (i32, i32) {
    %c0_i32 = arith.constant 0 : i32
    %c0_i32_0 = arith.constant 0 : i32
    return %c0_i32, %arg0 : i32, i32
  }
}

module attributes {stable_mosaic.version = 11 : i64} {
  func.func @_fused_matmul_kernel(%arg0: i32, %arg1: i32, %arg2: memref<1x128x128xbf16, #tpu.memory_space<vmem>>, %arg3: memref<88x128xbf16, #tpu.memory_space<vmem>>, %arg4: memref<88x1xf32, #tpu.memory_space<vmem>>, %arg5: memref<88x128xf32, #tpu.memory_space<vmem>>, %arg6: memref<88x128xf32, #tpu.memory_space<vmem>>) attributes {dimension_semantics = [#tpu.dimension_semantics<parallel>, #tpu.dimension_semantics<arbitrary>], iteration_bounds = array<i64: 1, 1>, scalar_prefetch = 0 : i64, scratch_operands = 1 : i64, tpu.core_type = #tpu.core_type<tc>, window_params = [{transform_indices = @transform_0, window_bounds = array<i64: 1, 128, 128>}, {pipeline_mode = #tpu.pipeline_mode<synchronous>, transform_indices = @transform_1, window_bounds = array<i64: 88, 128>}, {pipeline_mode = #tpu.pipeline_mode<synchronous>, transform_indices = @transform_2, window_bounds = array<i64: 88, 1>}, {transform_indices = @transform_3, window_bounds = array<i64: 88, 128>}]} {
    %c0_i32 = arith.constant 0 : i32
    %0 = arith.cmpi eq, %arg1, %c0_i32 : i32
    %1 = arith.extui %0 : i1 to i32
    %c0_i32_0 = arith.constant 0 : i32
    %2 = arith.cmpi ne, %1, %c0_i32_0 : i32
    scf.if %2 {
      %cst_11 = arith.constant 0xFF800000 : f32
      %13 = vector.broadcast %cst_11 : f32 to vector<88x128xf32>
      %c0_12 = arith.constant 0 : index
      %c0_13 = arith.constant 0 : index
      %14 = vector.load %arg6[%c0_12, %c0_13] : memref<88x128xf32, #tpu.memory_space<vmem>>, vector<88x128xf32>
      tpu.vector_store %arg6[%c0_12, %c0_13], %13 {strides = array<i32>} : memref<88x128xf32, #tpu.memory_space<vmem>>, vector<88x128xf32>,
    } else {
    }
    %c0 = arith.constant 0 : index
    %c0_1 = arith.constant 0 : index
    %3 = vector.load %arg3[%c0, %c0_1] : memref<88x128xbf16, #tpu.memory_space<vmem>>, vector<88x128xbf16>
    %c0_2 = arith.constant 0 : index
    %c0_3 = arith.constant 0 : index
    %c0_4 = arith.constant 0 : index
    %4 = vector.load %arg2[%c0_2, %c0_3, %c0_4] : memref<1x128x128xbf16, #tpu.memory_space<vmem>>, vector<1x128x128xbf16>
    %5 = vector.shape_cast %4 : vector<1x128x128xbf16> to vector<128x128xbf16>
    %cst = arith.constant dense<0.000000e+00> : vector<88x128xf32>
    %6 = tpu.matmul %3, %5, %cst {dimension_numbers = #tpu.dot_dimension_numbers<[1], [0], [0], [1], [0, 0, 1, 1], [], []>} : vector<88x128xbf16>, vector<128x128xbf16>, vector<88x128xf32> -> vector<88x128xf32>
    %c0_5 = arith.constant 0 : index
    %c0_6 = arith.constant 0 : index
    %7 = vector.load %arg6[%c0_5, %c0_6] : memref<88x128xf32, #tpu.memory_space<vmem>>, vector<88x128xf32>
    %8 = arith.maximumf %7, %6 : vector<88x128xf32>
    %c0_7 = arith.constant 0 : index
    %c0_8 = arith.constant 0 : index
    %9 = vector.load %arg6[%c0_7, %c0_8] : memref<88x128xf32, #tpu.memory_space<vmem>>, vector<88x128xf32>
    tpu.vector_store %arg6[%c0_7, %c0_8], %8 {strides = array<i32>} : memref<88x128xf32, #tpu.memory_space<vmem>>, vector<88x128xf32>,
    %c0_i32_9 = arith.constant 0 : i32
    %10 = arith.cmpi eq, %arg1, %c0_i32_9 : i32
    %11 = arith.extui %10 : i1 to i32
    %c0_i32_10 = arith.constant 0 : i32
    %12 = arith.cmpi ne, %11, %c0_i32_10 : i32
    scf.if %12 {
      %c0_11 = arith.constant 0 : index
      %c0_12 = arith.constant 0 : index
      %13 = vector.load %arg6[%c0_11, %c0_12] : memref<88x128xf32, #tpu.memory_space<vmem>>, vector<88x128xf32>
      %c0_13 = arith.constant 0 : index
      %c0_14 = arith.constant 0 : index
      %14 = vector.load %arg4[%c0_13, %c0_14] : memref<88x1xf32, #tpu.memory_space<vmem>>, vector<88x1xf32>
      %15 = vector.broadcast %14 : vector<88x1xf32> to vector<88x128xf32>
      %16 = arith.addf %13, %15 : vector<88x128xf32>
      %17 = math.tanh %16 : vector<88x128xf32>
      %c0_15 = arith.constant 0 : index
      %c0_16 = arith.constant 0 : index
      %18 = vector.load %arg5[%c0_15, %c0_16] : memref<88x128xf32, #tpu.memory_space<vmem>>, vector<88x128xf32>
      tpu.vector_store %arg5[%c0_15, %c0_16], %17 {strides = array<i32>} : memref<88x128xf32, #tpu.memory_space<vmem>>, vector<88x128xf32>,
    } else {
    }
    return
  }
  func.func @transform_0(%arg0: i32, %arg1: i32) -> (i32, i32, i32) {
    %c0_i32 = arith.constant 0 : i32
    %c0_i32_0 = arith.constant 0 : i32
    return %arg1, %c0_i32, %arg0 : i32, i32, i32
  }
  func.func @transform_1(%arg0: i32, %arg1: i32) -> (i32, i32) {
    %c0_i32 = arith.constant 0 : i32
    %c0_i32_0 = arith.constant 0 : i32
    %c0_i32_1 = arith.constant 0 : i32
    return %c0_i32, %c0_i32_0 : i32, i32
  }
  func.func @transform_2(%arg0: i32, %arg1: i32) -> (i32, i32) {
    %c0_i32 = arith.constant 0 : i32
    %c0_i32_0 = arith.constant 0 : i32
    %c0_i32_1 = arith.constant 0 : i32
    return %c0_i32, %c0_i32_0 : i32, i32
  }
  func.func @transform_3(%arg0: i32, %arg1: i32) -> (i32, i32) {
    %c0_i32 = arith.constant 0 : i32
    %c0_i32_0 = arith.constant 0 : i32
    return %c0_i32, %arg0 : i32, i32
  }
}

module attributes {stable_mosaic.version = 11 : i64} {
  func.func @_fused_matmul_kernel(%arg0: i32, %arg1: i32, %arg2: memref<1x96x128xbf16, #tpu.memory_space<vmem>>, %arg3: memref<16x96xbf16, #tpu.memory_space<vmem>>, %arg4: memref<16x1xf32, #tpu.memory_space<vmem>>, %arg5: memref<16x128xf32, #tpu.memory_space<vmem>>, %arg6: memref<16x128xf32, #tpu.memory_space<vmem>>) attributes {dimension_semantics = [#tpu.dimension_semantics<parallel>, #tpu.dimension_semantics<arbitrary>], iteration_bounds = array<i64: 1, 1>, scalar_prefetch = 0 : i64, scratch_operands = 1 : i64, tpu.core_type = #tpu.core_type<tc>, window_params = [{transform_indices = @transform_0, window_bounds = array<i64: 1, 96, 128>}, {pipeline_mode = #tpu.pipeline_mode<synchronous>, transform_indices = @transform_1, window_bounds = array<i64: 16, 96>}, {pipeline_mode = #tpu.pipeline_mode<synchronous>, transform_indices = @transform_2, window_bounds = array<i64: 16, 1>}, {transform_indices = @transform_3, window_bounds = array<i64: 16, 128>}]} {
    %c0_i32 = arith.constant 0 : i32
    %0 = arith.cmpi eq, %arg1, %c0_i32 : i32
    %1 = arith.extui %0 : i1 to i32
    %c0_i32_0 = arith.constant 0 : i32
    %2 = arith.cmpi ne, %1, %c0_i32_0 : i32
    scf.if %2 {
      %cst_11 = arith.constant 0xFF800000 : f32
      %13 = vector.broadcast %cst_11 : f32 to vector<16x128xf32>
      %c0_12 = arith.constant 0 : index
      %c0_13 = arith.constant 0 : index
      %14 = vector.load %arg6[%c0_12, %c0_13] : memref<16x128xf32, #tpu.memory_space<vmem>>, vector<16x128xf32>
      tpu.vector_store %arg6[%c0_12, %c0_13], %13 {strides = array<i32>} : memref<16x128xf32, #tpu.memory_space<vmem>>, vector<16x128xf32>,
    } else {
    }
    %c0 = arith.constant 0 : index
    %c0_1 = arith.constant 0 : index
    %3 = vector.load %arg3[%c0, %c0_1] : memref<16x96xbf16, #tpu.memory_space<vmem>>, vector<16x96xbf16>
    %c0_2 = arith.constant 0 : index
    %c0_3 = arith.constant 0 : index
    %c0_4 = arith.constant 0 : index
    %4 = vector.load %arg2[%c0_2, %c0_3, %c0_4] : memref<1x96x128xbf16, #tpu.memory_space<vmem>>, vector<1x96x128xbf16>
    %5 = vector.shape_cast %4 : vector<1x96x128xbf16> to vector<96x128xbf16>
    %cst = arith.constant dense<0.000000e+00> : vector<16x128xf32>
    %6 = tpu.matmul %3, %5, %cst {dimension_numbers = #tpu.dot_dimension_numbers<[1], [0], [0], [1], [0, 0, 1, 1], [], []>} : vector<16x96xbf16>, vector<96x128xbf16>, vector<16x128xf32> -> vector<16x128xf32>
    %c0_5 = arith.constant 0 : index
    %c0_6 = arith.constant 0 : index
    %7 = vector.load %arg6[%c0_5, %c0_6] : memref<16x128xf32, #tpu.memory_space<vmem>>, vector<16x128xf32>
    %8 = arith.maximumf %7, %6 : vector<16x128xf32>
    %c0_7 = arith.constant 0 : index
    %c0_8 = arith.constant 0 : index
    %9 = vector.load %arg6[%c0_7, %c0_8] : memref<16x128xf32, #tpu.memory_space<vmem>>, vector<16x128xf32>
    tpu.vector_store %arg6[%c0_7, %c0_8], %8 {strides = array<i32>} : memref<16x128xf32, #tpu.memory_space<vmem>>, vector<16x128xf32>,
    %c0_i32_9 = arith.constant 0 : i32
    %10 = arith.cmpi eq, %arg1, %c0_i32_9 : i32
    %11 = arith.extui %10 : i1 to i32
    %c0_i32_10 = arith.constant 0 : i32
    %12 = arith.cmpi ne, %11, %c0_i32_10 : i32
    scf.if %12 {
      %c0_11 = arith.constant 0 : index
      %c0_12 = arith.constant 0 : index
      %13 = vector.load %arg6[%c0_11, %c0_12] : memref<16x128xf32, #tpu.memory_space<vmem>>, vector<16x128xf32>
      %c0_13 = arith.constant 0 : index
      %c0_14 = arith.constant 0 : index
      %14 = vector.load %arg4[%c0_13, %c0_14] : memref<16x1xf32, #tpu.memory_space<vmem>>, vector<16x1xf32>
      %15 = vector.broadcast %14 : vector<16x1xf32> to vector<16x128xf32>
      %16 = arith.addf %13, %15 : vector<16x128xf32>
      %17 = math.tanh %16 : vector<16x128xf32>
      %c0_15 = arith.constant 0 : index
      %c0_16 = arith.constant 0 : index
      %18 = vector.load %arg5[%c0_15, %c0_16] : memref<16x128xf32, #tpu.memory_space<vmem>>, vector<16x128xf32>
      tpu.vector_store %arg5[%c0_15, %c0_16], %17 {strides = array<i32>} : memref<16x128xf32, #tpu.memory_space<vmem>>, vector<16x128xf32>,
    } else {
    }
    return
  }
  func.func @transform_0(%arg0: i32, %arg1: i32) -> (i32, i32, i32) {
    %c0_i32 = arith.constant 0 : i32
    %c0_i32_0 = arith.constant 0 : i32
    return %arg1, %c0_i32, %arg0 : i32, i32, i32
  }
  func.func @transform_1(%arg0: i32, %arg1: i32) -> (i32, i32) {
    %c0_i32 = arith.constant 0 : i32
    %c0_i32_0 = arith.constant 0 : i32
    %c0_i32_1 = arith.constant 0 : i32
    return %c0_i32, %c0_i32_0 : i32, i32
  }
  func.func @transform_2(%arg0: i32, %arg1: i32) -> (i32, i32) {
    %c0_i32 = arith.constant 0 : i32
    %c0_i32_0 = arith.constant 0 : i32
    %c0_i32_1 = arith.constant 0 : i32
    return %c0_i32, %c0_i32_0 : i32, i32
  }
  func.func @transform_3(%arg0: i32, %arg1: i32) -> (i32, i32) {
    %c0_i32 = arith.constant 0 : i32
    %c0_i32_0 = arith.constant 0 : i32
    return %c0_i32, %arg0 : i32, i32
  }
}

</mosaic_0001>

<llo_original>
// kernel: lenet5_forward.5
$region0: #{lenet5_forward.5}
  #allocation0 [shape = 'u32[]', space=smem, size = 0x4, offset = 0x4, fixed_abs, tag = 'smem constant byte address 0x4 - core index']
  #allocation1 [shape = 'u32[72,128]{1,0:T(1,128)}', space=vmem, size = 0x9000, scoped, tag = 'internal scratch']
  #allocation2 [shape = 'f32[8,512]{1,0:T(8,128)}', space=vmem, size = 0x4000, scoped, tag = 'scratch operand']
  %s0 = inlined_call_operand.vmem [shape: bf16[4,32,512], index: 0, kind: input, shape index: {}]
  %s1 = inlined_call_operand.vmem [shape: bf16[8,32], index: 1, kind: input, shape index: {}]
  %s2 = inlined_call_operand.vmem [shape: f32[8,1], index: 2, kind: input, shape index: {}]
  %s3 = inlined_call_operand.vmem [shape: f32[8,512], index: 3, kind: output, shape index: {}]
  %s4 = sld [smem:[#allocation0]]
  $region53: #{lenet5_forward.5} parent=0
    _
  %s6 = ssub.s32 1, %s4
  %s7 = scalar_select 0, %s6, %s4
  loop: start=0, step=1, limit=6
  $region2: #{lenet5_forward.5} parent=0 // loop_pre_header
    _
  $region3: #{lenet5_forward.5} parent=0 // loop_header
    %s9 = sphi 0, %s13
    %p10 = scmp.ge.s32.totalorder %s9, 6
    %s16 = sphi 0, %s28
    %s17 = sphi 0, %s24
    %s18 = sphi 0, %s16
    %s19 = sphi 0, %s17
    %s20 = sphi 0, %s18
    %s21 = sphi 0, %s19
    %s33 = sphi 0, %s35
    %s36 = sphi 0, %s33
    %s37 = sphi 0, %s36
    %s53 = sphi 0, %s37
    %s57 = sphi 0, %s57
    %s59 = sphi 0, %s57
    %s60 = sphi 0, %s59
    %s74 = sphi 0, %s60
    %s78 = sphi 0, %s78
    %s80 = sphi 0, %s78
    %s81 = sphi 0, %s80
    %s95 = sphi 0, %s81
    %s101 = sphi 0, %s103
    %s104 = sphi 0, %s101
    %s105 = sphi 0, %s104
    %s121 = sphi 0, %s105
  $region4: #{lenet5_forward.5} parent=0 // loop_header_branch
    %12 = sbr.rel (%p10) target = $region8
  $region5: #{lenet5_forward.5} parent=0 // loop_body
    %s14 = ssub.s32 %s9, 1
    %s15 = ssub.s32 %s9, 2
    %s22 = sadd.s32 1, %s17
    %p23 = scmp.ge.s32.totalorder %s22, 4
    %s24 = scalar_select %p23, 0, %s22
    %s25 = sadd.s32 1, %s16
    %s26 = scalar_select %p23, %s25, %s16
    %p27 = scmp.ge.s32.totalorder %s26, 1
    %s28 = scalar_select %p27, 0, %s26
    %s29 = ssub.s32 %s17, %s24
    %s30 = ssub.s32 %s16, %s28
    %s31 = sor.u32 %s29, %s30
    %p32 = scmp.eq.s32.totalorder %s31, 0
    %s34 = sadd.s32 %s33, 1
    %s35 = scalar_select %p32, %s33, %s34
    %p38 = pneg %p32
    %p39 = scmp.eq.s32.totalorder %s9, 3
    %p40 = por %p38, %p39
    %p41 = scmp.ne.s32.totalorder %s33, %s36
    %p42 = scmp.eq.s32.totalorder %s9, 0
    %p43 = por %p41, %p42
    %p44 = scmp.ne.s32.totalorder %s33, %s36
    %p45 = scmp.eq.s32.totalorder %s14, 3
    %p46 = por %p44, %p45
    %p47 = scmp.ne.s32.totalorder %s36, %s37
    %p48 = scmp.eq.s32.totalorder %s14, 0
    %p49 = por %p47, %p48
    %p50 = scmp.ne.s32.totalorder %s36, %s37
    %p51 = scmp.eq.s32.totalorder %s15, 3
    %p52 = por %p50, %p51
    %p54 = scmp.ne.s32.totalorder %s37, %s53
    %p55 = scmp.eq.s32.totalorder %s15, 0
    %p56 = por %p54, %p55
    %s58 = sadd.s32 %s57, 1
    %p61 = scmp.eq.s32.totalorder %s9, 3
    %p62 = scmp.ne.s32.totalorder %s57, %s59
    %p63 = scmp.eq.s32.totalorder %s9, 0
    %p64 = por %p62, %p63
    %p65 = scmp.ne.s32.totalorder %s57, %s59
    %p66 = scmp.eq.s32.totalorder %s14, 3
    %p67 = por %p65, %p66
    %p68 = scmp.ne.s32.totalorder %s59, %s60
    %p69 = scmp.eq.s32.totalorder %s14, 0
    %p70 = por %p68, %p69
    %p71 = scmp.ne.s32.totalorder %s59, %s60
    %p72 = scmp.eq.s32.totalorder %s15, 3
    %p73 = por %p71, %p72
    %p75 = scmp.ne.s32.totalorder %s60, %s74
    %p76 = scmp.eq.s32.totalorder %s15, 0
    %p77 = por %p75, %p76
    %s79 = sadd.s32 %s78, 1
    %p82 = scmp.eq.s32.totalorder %s9, 3
    %p83 = scmp.ne.s32.totalorder %s78, %s80
    %p84 = scmp.eq.s32.totalorder %s9, 0
    %p85 = por %p83, %p84
    %p86 = scmp.ne.s32.totalorder %s78, %s80
    %p87 = scmp.eq.s32.totalorder %s14, 3
    %p88 = por %p86, %p87
    %p89 = scmp.ne.s32.totalorder %s80, %s81
    %p90 = scmp.eq.s32.totalorder %s14, 0
    %p91 = por %p89, %p90
    %p92 = scmp.ne.s32.totalorder %s80, %s81
    %p93 = scmp.eq.s32.totalorder %s15, 3
    %p94 = por %p92, %p93
    %p96 = scmp.ne.s32.totalorder %s81, %s95
    %p97 = scmp.eq.s32.totalorder %s15, 0
    %p98 = por %p96, %p97
    %s99 = ssub.s32 %s16, %s28
    %p100 = scmp.eq.s32.totalorder %s99, 0
    %s102 = sadd.s32 %s101, 1
    %s103 = scalar_select %p100, %s101, %s102
    %p106 = pneg %p100
    %p107 = scmp.eq.s32.totalorder %s9, 3
    %p108 = por %p106, %p107
    %p109 = scmp.ne.s32.totalorder %s101, %s104
    %p110 = scmp.eq.s32.totalorder %s9, 0
    %p111 = por %p109, %p110
    %p112 = scmp.ne.s32.totalorder %s101, %s104
    %p113 = scmp.eq.s32.totalorder %s14, 3
    %p114 = por %p112, %p113
    %p115 = scmp.ne.s32.totalorder %s104, %s105
    %p116 = scmp.eq.s32.totalorder %s14, 0
    %p117 = por %p115, %p116
    %p118 = scmp.ne.s32.totalorder %s104, %s105
    %p119 = scmp.eq.s32.totalorder %s15, 3
    %p120 = por %p118, %p119
    %p122 = scmp.ne.s32.totalorder %s105, %s121
    %p123 = scmp.eq.s32.totalorder %s15, 0
    %p124 = por %p122, %p123
    %p125 = scmp.le.s32.totalorder 1, %s9
    %p126 = scmp.lt.s32.totalorder %s9, 5
    %p127 = pnand %p125, %p126
    %p128 = pneg %p127
    // Predicated region
    $region9: #{lenet5_forward.5} parent=5 // pred_check
      _
    $region10: #{lenet5_forward.5} parent=5 // pred_check_branch
      %130 = sbr.rel (%p127) target = $region12
    $region11: #{lenet5_forward.5} parent=5 // pred_region
      %s131 = ssub.s32 %s9, 1
      // Predicated region
      $region13: #{lenet5_forward.5} parent=11 // pred_check
        %p132 = pneg %p70
      $region14: #{lenet5_forward.5} parent=11 // pred_check_branch
        %134 = sbr.rel (%p132) target = $region16
      $region15: #{lenet5_forward.5} parent=11 // pred_region
        _
      $region16: #{lenet5_forward.5} parent=11 // pred_fallthru
        _
      // Predicated region
      $region17: #{lenet5_forward.5} parent=11 // pred_check
        %p135 = pneg %p91
      $region18: #{lenet5_forward.5} parent=11 // pred_check_branch
        %137 = sbr.rel (%p135) target = $region20
      $region19: #{lenet5_forward.5} parent=11 // pred_region
        _
      $region20: #{lenet5_forward.5} parent=11 // pred_fallthru
        _
    $region12: #{lenet5_forward.5} parent=5 // pred_fallthru
      _
    %p138 = scmp.lt.s32.totalorder %s9, 4
    // Predicated region
    $region21: #{lenet5_forward.5} parent=5 // pred_check
      %p139 = pneg %p138
    $region22: #{lenet5_forward.5} parent=5 // pred_check_branch
      %141 = sbr.rel (%p139) target = $region24
    $region23: #{lenet5_forward.5} parent=5 // pred_region
      // Predicated region
      $region25: #{lenet5_forward.5} parent=23 // pred_check
        %p142 = pneg %p43
      $region26: #{lenet5_forward.5} parent=23 // pred_check_branch
        %144 = sbr.rel (%p142) target = $region28
      $region27: #{lenet5_forward.5} parent=23 // pred_region
        %s145 = smul.u32 4, %s16
        %p146 = scmp.lt.s32.totalorder %s17, 3
        %s147 = scalar_select %p146, %s17, 3
        %p148 = scmp.lt.s32.totalorder %s145, 3
        %s149 = scalar_select %p148, %s145, 3
        %s150 = smul.addr %s147, 16
        %s151 = sadd.s32 %s149, %s150
        %s152 = smul.addr %s151, 4
        %s153 = scalar_lea.vmem %s0, %s152
        %s154 = smul.u32 4, %s16
      $region28: #{lenet5_forward.5} parent=23 // pred_fallthru
        _
    $region24: #{lenet5_forward.5} parent=5 // pred_fallthru
      _
    %p155 = scmp.le.s32.totalorder 1, %s9
    %p156 = scmp.lt.s32.totalorder %s9, 5
    %p157 = pnand %p155, %p156
    %p158 = pneg %p157
    // Predicated region
    $region29: #{lenet5_forward.5} parent=5 // pred_check
      _
    $region30: #{lenet5_forward.5} parent=5 // pred_check_branch
      %160 = sbr.rel (%p157) target = $region32
    $region31: #{lenet5_forward.5} parent=5 // pred_region
      %s161 = ssub.s32 %s9, 1
      %s162 = smul.u32 4, %s18
      %p163 = scmp.lt.s32.totalorder %s19, 3
      %s164 = scalar_select %p163, %s19, 3
      %p165 = scmp.lt.s32.totalorder %s162, 3
      %s166 = scalar_select %p165, %s162, 3
      %s167 = smul.addr %s164, 16
      %s168 = sadd.s32 %s166, %s167
      %s169 = smul.addr %s168, 4
      %s170 = scalar_lea.vmem %s0, %s169
      %p171 = pneg %p49
      %p172 = pneg %p46
      %p173 = pneg %p70
      %p174 = pneg %p67
      %p175 = pneg %p91
      %p176 = pneg %p88
      %p177 = pneg %p117
      %p178 = pneg %p114
      %s179 = smul.u32 4, %s18
      %p180 = scmp.lt.s32.totalorder %s179, 3
      %s181 = scalar_select %p180, %s179, 3
      %s182 = smul.addr %s181, 8
      %s183 = scalar_lea.vmem %s3, %s182
      %s184 = smul.u32 4, %s18
      %p185 = scmp.lt.s32.totalorder %s19, 3
      %s186 = scalar_select %p185, %s19, 3
      %p187 = scmp.lt.s32.totalorder %s184, 3
      %s188 = scalar_select %p187, %s184, 3
      %s189 = smul.addr %s186, 16
      %s190 = sadd.s32 %s188, %s189
      %s191 = smul.addr %s190, 4
      %s192 = scalar_lea.vmem %s0, %s191
      %s193 = smul.u32 4, %s18
      %s194 = smul.u32 4, %s18
      %p195 = scmp.lt.s32.totalorder %s194, 3
      %s196 = scalar_select %p195, %s194, 3
      %s197 = smul.addr %s196, 8
      %s198 = scalar_lea.vmem %s3, %s197
      %s199 = smul.u32 4, %s18
      %p201 = scmp.eq.s32.totalorder %s19, 0
      // Predicated region
      $region33: #{lenet5_forward.5} parent=31 // pred_check
        %p202 = pneg %p201
      $region34: #{lenet5_forward.5} parent=31 // pred_check_branch
        %204 = sbr.rel (%p202) target = $region36
      $region35: #{lenet5_forward.5} parent=31 // pred_region
        %205 = vst [vmem:[#allocation2] sm:$0xff] -inf
        %206 = vst [vmem:[#allocation2 + $0x8] sm:$0xff] -inf
        %207 = vst [vmem:[#allocation2 + $0x10] sm:$0xff] -inf
        %208 = vst [vmem:[#allocation2 + $0x18] sm:$0xff] -inf
      $region36: #{lenet5_forward.5} parent=31 // pred_fallthru
        _
      %v209 = vld [vmem:[%s1] sm:$0xf]
      %v210 = vld [vmem:[%s192] sm:$0xff]
      %v211 = vld [vmem:[%s192 + $0x8] sm:$0xff]
      %v212 = vld [vmem:[%s192 + $0x10] sm:$0xff]
      %v213 = vld [vmem:[%s192 + $0x18] sm:$0xff]
      %v214 = vld [vmem:[%s192 + $0x20] sm:$0xff]
      %v215 = vld [vmem:[%s192 + $0x28] sm:$0xff]
      %v216 = vld [vmem:[%s192 + $0x30] sm:$0xff]
      %v217 = vld [vmem:[%s192 + $0x38] sm:$0xff]
      %v226 = vunpack.c.l.b16 %v210
      %v227 = vunpack.c.h.b16 %v210
      %v228 = vunpack.c.l.b16 %v211
      %v229 = vunpack.c.h.b16 %v211
      %v230 = vunpack.c.l.b16 %v212
      %v231 = vunpack.c.h.b16 %v212
      %v232 = vunpack.c.l.b16 %v213
      %v233 = vunpack.c.h.b16 %v213
      %v234 = vunpack.c.l.b16 %v214
      %v235 = vunpack.c.h.b16 %v214
      %v236 = vunpack.c.l.b16 %v215
      %v237 = vunpack.c.h.b16 %v215
      %v238 = vunpack.c.l.b16 %v216
      %v239 = vunpack.c.h.b16 %v216
      %v240 = vunpack.c.l.b16 %v217
      %v241 = vunpack.c.h.b16 %v217
      %v242 = vpack.c.b16 %v230, %v226
      %v243 = vpack.c.b16 %v231, %v227
      %v244 = vpack.c.b16 %v232, %v228
      %v245 = vpack.c.b16 %v233, %v229
      %v246 = vpack.c.b16 %v238, %v234
      %v247 = vpack.c.b16 %v239, %v235
      %v248 = vpack.c.b16 %v240, %v236
      %v249 = vpack.c.b16 %v241, %v237
      %vm258 = vcmask 261120
      %v260 = vsel %vm258, %v209, 0
      %262 = vmatpush.bf16.msra.mxu0 0
      %263 = vmatpush.bf16.msra.mxu0 0
      %264 = vmatpush.bf16.msra.mxu0 0
      %265 = vmatpush.bf16.msra.mxu0 0
      %266 = vmatpush.bf16.msra.mxu0 0
      %267 = vmatpush.bf16.msra.mxu0 0
      %268 = vmatpush.bf16.msra.mxu0 %v246
      %269 = vmatpush.bf16.msra.mxu0 %v242
      %270 = vmatmul.bf16.gmra.mxu0 %v260
      %v271 = vpop.f32.mrf.mxu0
      %v272 = vadd.f32 0.0, %v271
      %v273 = vpop.f32.mrf.mxu0
      %274 = vdwg.mxu0
      %275 = vmatpush.bf16.msra.mxu0 0
      %276 = vmatpush.bf16.msra.mxu0 0
      %277 = vmatpush.bf16.msra.mxu0 0
      %278 = vmatpush.bf16.msra.mxu0 0
      %279 = vmatpush.bf16.msra.mxu0 0
      %280 = vmatpush.bf16.msra.mxu0 0
      %281 = vmatpush.bf16.msra.mxu0 %v247
      %282 = vmatpush.bf16.msra.mxu0 %v243
      %283 = vmatmul.bf16.gmra.mxu0 %v260
      %v284 = vpop.f32.mrf.mxu0
      %v285 = vadd.f32 0.0, %v284
      %v286 = vpop.f32.mrf.mxu0
      %287 = vdwg.mxu0
      %288 = vmatpush.bf16.msra.mxu0 0
      %289 = vmatpush.bf16.msra.mxu0 0
      %290 = vmatpush.bf16.msra.mxu0 0
      %291 = vmatpush.bf16.msra.mxu0 0
      %292 = vmatpush.bf16.msra.mxu0 0
      %293 = vmatpush.bf16.msra.mxu0 0
      %294 = vmatpush.bf16.msra.mxu0 %v248
      %295 = vmatpush.bf16.msra.mxu0 %v244
      %296 = vmatmul.bf16.gmra.mxu0 %v260
      %v297 = vpop.f32.mrf.mxu0
      %v298 = vadd.f32 0.0, %v297
      %v299 = vpop.f32.mrf.mxu0
      %300 = vdwg.mxu0
      %301 = vmatpush.bf16.msra.mxu0 0
      %302 = vmatpush.bf16.msra.mxu0 0
      %303 = vmatpush.bf16.msra.mxu0 0
      %304 = vmatpush.bf16.msra.mxu0 0
      %305 = vmatpush.bf16.msra.mxu0 0
      %306 = vmatpush.bf16.msra.mxu0 0
      %307 = vmatpush.bf16.msra.mxu0 %v249
      %308 = vmatpush.bf16.msra.mxu0 %v245
      %309 = vmatmul.bf16.gmra.mxu0 %v260
      %v310 = vpop.f32.mrf.mxu0
      %v311 = vadd.f32 0.0, %v310
      %v312 = vpop.f32.mrf.mxu0
      %313 = vdwg.mxu0
      %v314 = vld [vmem:[#allocation2] sm:$0xff]
      %v315 = vld [vmem:[#allocation2 + $0x8] sm:$0xff]
      %v316 = vld [vmem:[#allocation2 + $0x10] sm:$0xff]
      %v317 = vld [vmem:[#allocation2 + $0x18] sm:$0xff]
      %v318 = vmax.f32 %v314, %v272
      %v319 = vmax.f32 %v315, %v285
      %v320 = vmax.f32 %v316, %v298
      %v321 = vmax.f32 %v317, %v311
      %322 = vst [vmem:[#allocation2] sm:$0xff] %v318
      %323 = vst [vmem:[#allocation2 + $0x8] sm:$0xff] %v319
      %324 = vst [vmem:[#allocation2 + $0x10] sm:$0xff] %v320
      %325 = vst [vmem:[#allocation2 + $0x18] sm:$0xff] %v321
      %p326 = scmp.eq.s32.totalorder %s19, 3
      // Predicated region
      $region37: #{lenet5_forward.5} parent=31 // pred_check
        %p327 = pneg %p326
      $region38: #{lenet5_forward.5} parent=31 // pred_check_branch
        %329 = sbr.rel (%p327) target = $region40
      $region39: #{lenet5_forward.5} parent=31 // pred_region
        %v330 = vld [vmem:[#allocation2] sm:$0xff]
        %v331 = vld [vmem:[#allocation2 + $0x8] sm:$0xff]
        %v332 = vld [vmem:[#allocation2 + $0x10] sm:$0xff]
        %v333 = vld [vmem:[#allocation2 + $0x18] sm:$0xff]
        %v334 = vld [vmem:[%s2] sm:$0xff]
        %336 = vset.pattern.permute.xlu0 0
        %337 = vperm.xlu0 %336, %v334
        %v338 = vpop.permute.xlu0 %337
        %v340 = vadd.f32 %v330, %v338
        %v341 = vadd.f32 %v331, %v338
        %v342 = vadd.f32 %v332, %v338
        %v343 = vadd.f32 %v333, %v338
        %v344 = vtanh.pop %v340
        %v345 = vtanh.pop %v341
        %v346 = vtanh.pop %v342
        %v347 = vtanh.pop %v343
        %348 = vst [vmem:[%s198] sm:$0xff] %v344
        %349 = vst [vmem:[%s198 + $0x8] sm:$0xff] %v345
        %350 = vst [vmem:[%s198 + $0x10] sm:$0xff] %v346
        %351 = vst [vmem:[%s198 + $0x18] sm:$0xff] %v347
      $region40: #{lenet5_forward.5} parent=31 // pred_fallthru
        _
      %s352 = smul.u32 4, %s18
      %p353 = scmp.lt.s32.totalorder %s352, 3
      %s354 = scalar_select %p353, %s352, 3
      %s355 = smul.addr %s354, 8
      %s356 = scalar_lea.vmem %s3, %s355
      // Predicated region
      $region41: #{lenet5_forward.5} parent=31 // pred_check
        %p357 = pneg %p114
      $region42: #{lenet5_forward.5} parent=31 // pred_check_branch
        %359 = sbr.rel (%p357) target = $region44
      $region43: #{lenet5_forward.5} parent=31 // pred_region
        %s360 = smul.u32 4, %s18
      $region44: #{lenet5_forward.5} parent=31 // pred_fallthru
        _
      // Predicated region
      $region45: #{lenet5_forward.5} parent=31 // pred_check
        %p361 = pneg %p114
      $region46: #{lenet5_forward.5} parent=31 // pred_check_branch
        %363 = sbr.rel (%p361) target = $region48
      $region47: #{lenet5_forward.5} parent=31 // pred_region
        %s364 = smul.u32 4, %s18
        %p365 = scmp.lt.s32.totalorder %s364, 3
        %s366 = scalar_select %p365, %s364, 3
        %s367 = smul.addr %s366, 8
        %s368 = scalar_lea.vmem %s3, %s367
      $region48: #{lenet5_forward.5} parent=31 // pred_fallthru
        _
    $region32: #{lenet5_forward.5} parent=5 // pred_fallthru
      _
    %p369 = scmp.le.s32.totalorder 2, %s9
    // Predicated region
    $region49: #{lenet5_forward.5} parent=5 // pred_check
      %p370 = pneg %p369
    $region50: #{lenet5_forward.5} parent=5 // pred_check_branch
      %372 = sbr.rel (%p370) target = $region52
    $region51: #{lenet5_forward.5} parent=5 // pred_region
      %s373 = ssub.s32 %s9, 2
    $region52: #{lenet5_forward.5} parent=5 // pred_fallthru
      _
  $region6: #{lenet5_forward.5} parent=0 // loop_footer
    %s13 = sadd.s32 1, %s9
  $region7: #{lenet5_forward.5} parent=0 // loop_footer_branch
    %8 = sbr.rel target = $region3
  $region8: #{lenet5_forward.5} parent=0 // loop_exit
    _

// kernel: lenet5_forward.6
$region0: #{lenet5_forward.6}
  #allocation0 [shape = 'u32[]', space=smem, size = 0x4, offset = 0x4, fixed_abs, tag = 'smem constant byte address 0x4 - core index']
  #allocation1 [shape = 'u32[72,128]{1,0:T(1,128)}', space=vmem, size = 0x9000, scoped, tag = 'internal scratch']
  #allocation2 [shape = 'f32[16,128]{1,0:T(8,128)}', space=vmem, size = 0x2000, scoped, tag = 'scratch operand']
  %s0 = inlined_call_operand.vmem [shape: bf16[4,160,128], index: 0, kind: input, shape index: {}]
  %s1 = inlined_call_operand.vmem [shape: bf16[16,160], index: 1, kind: input, shape index: {}]
  %s2 = inlined_call_operand.vmem [shape: f32[16,1], index: 2, kind: input, shape index: {}]
  %s3 = inlined_call_operand.vmem [shape: f32[16,128], index: 3, kind: output, shape index: {}]
  %s4 = sld [smem:[#allocation0]]
  $region53: #{lenet5_forward.6} parent=0
    _
  %s6 = ssub.s32 1, %s4
  %s7 = scalar_select 0, %s6, %s4
  loop: start=0, step=1, limit=6
  $region2: #{lenet5_forward.6} parent=0 // loop_pre_header
    _
  $region3: #{lenet5_forward.6} parent=0 // loop_header
    %s9 = sphi 0, %s13
    %p10 = scmp.ge.s32.totalorder %s9, 6
    %s16 = sphi 0, %s28
    %s17 = sphi 0, %s24
    %s18 = sphi 0, %s16
    %s19 = sphi 0, %s17
    %s20 = sphi 0, %s18
    %s21 = sphi 0, %s19
    %s33 = sphi 0, %s35
    %s36 = sphi 0, %s33
    %s37 = sphi 0, %s36
    %s53 = sphi 0, %s37
    %s57 = sphi 0, %s57
    %s59 = sphi 0, %s57
    %s60 = sphi 0, %s59
    %s74 = sphi 0, %s60
    %s78 = sphi 0, %s78
    %s80 = sphi 0, %s78
    %s81 = sphi 0, %s80
    %s95 = sphi 0, %s81
    %s101 = sphi 0, %s103
    %s104 = sphi 0, %s101
    %s105 = sphi 0, %s104
    %s121 = sphi 0, %s105
  $region4: #{lenet5_forward.6} parent=0 // loop_header_branch
    %12 = sbr.rel (%p10) target = $region8
  $region5: #{lenet5_forward.6} parent=0 // loop_body
    %s14 = ssub.s32 %s9, 1
    %s15 = ssub.s32 %s9, 2
    %s22 = sadd.s32 1, %s17
    %p23 = scmp.ge.s32.totalorder %s22, 4
    %s24 = scalar_select %p23, 0, %s22
    %s25 = sadd.s32 1, %s16
    %s26 = scalar_select %p23, %s25, %s16
    %p27 = scmp.ge.s32.totalorder %s26, 1
    %s28 = scalar_select %p27, 0, %s26
    %s29 = ssub.s32 %s17, %s24
    %s30 = ssub.s32 %s16, %s28
    %s31 = sor.u32 %s29, %s30
    %p32 = scmp.eq.s32.totalorder %s31, 0
    %s34 = sadd.s32 %s33, 1
    %s35 = scalar_select %p32, %s33, %s34
    %p38 = pneg %p32
    %p39 = scmp.eq.s32.totalorder %s9, 3
    %p40 = por %p38, %p39
    %p41 = scmp.ne.s32.totalorder %s33, %s36
    %p42 = scmp.eq.s32.totalorder %s9, 0
    %p43 = por %p41, %p42
    %p44 = scmp.ne.s32.totalorder %s33, %s36
    %p45 = scmp.eq.s32.totalorder %s14, 3
    %p46 = por %p44, %p45
    %p47 = scmp.ne.s32.totalorder %s36, %s37
    %p48 = scmp.eq.s32.totalorder %s14, 0
    %p49 = por %p47, %p48
    %p50 = scmp.ne.s32.totalorder %s36, %s37
    %p51 = scmp.eq.s32.totalorder %s15, 3
    %p52 = por %p50, %p51
    %p54 = scmp.ne.s32.totalorder %s37, %s53
    %p55 = scmp.eq.s32.totalorder %s15, 0
    %p56 = por %p54, %p55
    %s58 = sadd.s32 %s57, 1
    %p61 = scmp.eq.s32.totalorder %s9, 3
    %p62 = scmp.ne.s32.totalorder %s57, %s59
    %p63 = scmp.eq.s32.totalorder %s9, 0
    %p64 = por %p62, %p63
    %p65 = scmp.ne.s32.totalorder %s57, %s59
    %p66 = scmp.eq.s32.totalorder %s14, 3
    %p67 = por %p65, %p66
    %p68 = scmp.ne.s32.totalorder %s59, %s60
    %p69 = scmp.eq.s32.totalorder %s14, 0
    %p70 = por %p68, %p69
    %p71 = scmp.ne.s32.totalorder %s59, %s60
    %p72 = scmp.eq.s32.totalorder %s15, 3
    %p73 = por %p71, %p72
    %p75 = scmp.ne.s32.totalorder %s60, %s74
    %p76 = scmp.eq.s32.totalorder %s15, 0
    %p77 = por %p75, %p76
    %s79 = sadd.s32 %s78, 1
    %p82 = scmp.eq.s32.totalorder %s9, 3
    %p83 = scmp.ne.s32.totalorder %s78, %s80
    %p84 = scmp.eq.s32.totalorder %s9, 0
    %p85 = por %p83, %p84
    %p86 = scmp.ne.s32.totalorder %s78, %s80
    %p87 = scmp.eq.s32.totalorder %s14, 3
    %p88 = por %p86, %p87
    %p89 = scmp.ne.s32.totalorder %s80, %s81
    %p90 = scmp.eq.s32.totalorder %s14, 0
    %p91 = por %p89, %p90
    %p92 = scmp.ne.s32.totalorder %s80, %s81
    %p93 = scmp.eq.s32.totalorder %s15, 3
    %p94 = por %p92, %p93
    %p96 = scmp.ne.s32.totalorder %s81, %s95
    %p97 = scmp.eq.s32.totalorder %s15, 0
    %p98 = por %p96, %p97
    %s99 = ssub.s32 %s16, %s28
    %p100 = scmp.eq.s32.totalorder %s99, 0
    %s102 = sadd.s32 %s101, 1
    %s103 = scalar_select %p100, %s101, %s102
    %p106 = pneg %p100
    %p107 = scmp.eq.s32.totalorder %s9, 3
    %p108 = por %p106, %p107
    %p109 = scmp.ne.s32.totalorder %s101, %s104
    %p110 = scmp.eq.s32.totalorder %s9, 0
    %p111 = por %p109, %p110
    %p112 = scmp.ne.s32.totalorder %s101, %s104
    %p113 = scmp.eq.s32.totalorder %s14, 3
    %p114 = por %p112, %p113
    %p115 = scmp.ne.s32.totalorder %s104, %s105
    %p116 = scmp.eq.s32.totalorder %s14, 0
    %p117 = por %p115, %p116
    %p118 = scmp.ne.s32.totalorder %s104, %s105
    %p119 = scmp.eq.s32.totalorder %s15, 3
    %p120 = por %p118, %p119
    %p122 = scmp.ne.s32.totalorder %s105, %s121
    %p123 = scmp.eq.s32.totalorder %s15, 0
    %p124 = por %p122, %p123
    %p125 = scmp.le.s32.totalorder 1, %s9
    %p126 = scmp.lt.s32.totalorder %s9, 5
    %p127 = pnand %p125, %p126
    %p128 = pneg %p127
    // Predicated region
    $region9: #{lenet5_forward.6} parent=5 // pred_check
      _
    $region10: #{lenet5_forward.6} parent=5 // pred_check_branch
      %130 = sbr.rel (%p127) target = $region12
    $region11: #{lenet5_forward.6} parent=5 // pred_region
      %s131 = ssub.s32 %s9, 1
      // Predicated region
      $region13: #{lenet5_forward.6} parent=11 // pred_check
        %p132 = pneg %p70
      $region14: #{lenet5_forward.6} parent=11 // pred_check_branch
        %134 = sbr.rel (%p132) target = $region16
      $region15: #{lenet5_forward.6} parent=11 // pred_region
        _
      $region16: #{lenet5_forward.6} parent=11 // pred_fallthru
        _
      // Predicated region
      $region17: #{lenet5_forward.6} parent=11 // pred_check
        %p135 = pneg %p91
      $region18: #{lenet5_forward.6} parent=11 // pred_check_branch
        %137 = sbr.rel (%p135) target = $region20
      $region19: #{lenet5_forward.6} parent=11 // pred_region
        _
      $region20: #{lenet5_forward.6} parent=11 // pred_fallthru
        _
    $region12: #{lenet5_forward.6} parent=5 // pred_fallthru
      _
    %p138 = scmp.lt.s32.totalorder %s9, 4
    // Predicated region
    $region21: #{lenet5_forward.6} parent=5 // pred_check
      %p139 = pneg %p138
    $region22: #{lenet5_forward.6} parent=5 // pred_check_branch
      %141 = sbr.rel (%p139) target = $region24
    $region23: #{lenet5_forward.6} parent=5 // pred_region
      // Predicated region
      $region25: #{lenet5_forward.6} parent=23 // pred_check
        %p142 = pneg %p43
      $region26: #{lenet5_forward.6} parent=23 // pred_check_branch
        %144 = sbr.rel (%p142) target = $region28
      $region27: #{lenet5_forward.6} parent=23 // pred_region
        %p145 = scmp.lt.s32.totalorder %s17, 3
        %s146 = scalar_select %p145, %s17, 3
        %p147 = scmp.lt.s32.totalorder %s16, 0
        %s148 = scalar_select %p147, %s16, 0
        %s149 = smul.addr %s146, 20
        %s150 = sadd.s32 %s148, %s149
        %s151 = smul.addr %s150, 4
        %s152 = scalar_lea.vmem %s0, %s151
      $region28: #{lenet5_forward.6} parent=23 // pred_fallthru
        _
    $region24: #{lenet5_forward.6} parent=5 // pred_fallthru
      _
    %p153 = scmp.le.s32.totalorder 1, %s9
    %p154 = scmp.lt.s32.totalorder %s9, 5
    %p155 = pnand %p153, %p154
    %p156 = pneg %p155
    // Predicated region
    $region29: #{lenet5_forward.6} parent=5 // pred_check
      _
    $region30: #{lenet5_forward.6} parent=5 // pred_check_branch
      %158 = sbr.rel (%p155) target = $region32
    $region31: #{lenet5_forward.6} parent=5 // pred_region
      %s159 = ssub.s32 %s9, 1
      %p160 = scmp.lt.s32.totalorder %s19, 3
      %s161 = scalar_select %p160, %s19, 3
      %p162 = scmp.lt.s32.totalorder %s18, 0
      %s163 = scalar_select %p162, %s18, 0
      %s164 = smul.addr %s161, 20
      %s165 = sadd.s32 %s163, %s164
      %s166 = smul.addr %s165, 4
      %s167 = scalar_lea.vmem %s0, %s166
      %p168 = pneg %p49
      %p169 = pneg %p46
      %p170 = pneg %p70
      %p171 = pneg %p67
      %p172 = pneg %p91
      %p173 = pneg %p88
      %p174 = pneg %p117
      %p175 = pneg %p114
      %p176 = scmp.lt.s32.totalorder %s18, 0
      %s177 = scalar_select %p176, %s18, 0
      %s178 = smul.addr %s177, 8
      %s179 = scalar_lea.vmem %s3, %s178
      %p180 = scmp.lt.s32.totalorder %s19, 3
      %s181 = scalar_select %p180, %s19, 3
      %p182 = scmp.lt.s32.totalorder %s18, 0
      %s183 = scalar_select %p182, %s18, 0
      %s184 = smul.addr %s181, 20
      %s185 = sadd.s32 %s183, %s184
      %s186 = smul.addr %s185, 4
      %s187 = scalar_lea.vmem %s0, %s186
      %p188 = scmp.lt.s32.totalorder %s18, 0
      %s189 = scalar_select %p188, %s18, 0
      %s190 = smul.addr %s189, 8
      %s191 = scalar_lea.vmem %s3, %s190
      %p193 = scmp.eq.s32.totalorder %s19, 0
      // Predicated region
      $region33: #{lenet5_forward.6} parent=31 // pred_check
        %p194 = pneg %p193
      $region34: #{lenet5_forward.6} parent=31 // pred_check_branch
        %196 = sbr.rel (%p194) target = $region36
      $region35: #{lenet5_forward.6} parent=31 // pred_region
        %197 = vst [vmem:[#allocation2] sm:$0xff] -inf
        %198 = vst [vmem:[#allocation2 + $0x8] sm:$0xff] -inf
      $region36: #{lenet5_forward.6} parent=31 // pred_fallthru
        _
      %v199 = vld [vmem:[%s1] sm:$0xff]
      %v200 = vld [vmem:[%s1 + $0x8] sm:$0xff]
      %v201 = vld [vmem:[%s187] sm:$0xf]
      %v202 = vld [vmem:[%s187 + $0x4] sm:$0xf]
      %v203 = vld [vmem:[%s187 + $0x8] sm:$0xf]
      %v204 = vld [vmem:[%s187 + $0xc] sm:$0xf]
      %v205 = vld [vmem:[%s187 + $0x10] sm:$0xf]
      %v206 = vld [vmem:[%s187 + $0x14] sm:$0xf]
      %v207 = vld [vmem:[%s187 + $0x18] sm:$0xf]
      %v208 = vld [vmem:[%s187 + $0x1c] sm:$0xf]
      %v209 = vld [vmem:[%s187 + $0x20] sm:$0xf]
      %v210 = vld [vmem:[%s187 + $0x24] sm:$0xf]
      %v211 = vld [vmem:[%s187 + $0x28] sm:$0xf]
      %v212 = vld [vmem:[%s187 + $0x2c] sm:$0xf]
      %v213 = vld [vmem:[%s187 + $0x30] sm:$0xf]
      %v214 = vld [vmem:[%s187 + $0x34] sm:$0xf]
      %v215 = vld [vmem:[%s187 + $0x38] sm:$0xf]
      %v216 = vld [vmem:[%s187 + $0x3c] sm:$0xf]
      %v217 = vld [vmem:[%s187 + $0x40] sm:$0xf]
      %v218 = vld [vmem:[%s187 + $0x44] sm:$0xf]
      %v219 = vld [vmem:[%s187 + $0x48] sm:$0xf]
      %v220 = vld [vmem:[%s187 + $0x4c] sm:$0xf]
      %v223 = vunpack.c.l.b16 %v199
      %v224 = vunpack.c.h.b16 %v199
      %v225 = vunpack.c.l.b16 %v200
      %v226 = vunpack.c.h.b16 %v200
      %v227 = vpack.c.b16 %v225, %v223
      %v228 = vpack.c.b16 %v226, %v224
      %v250 = vunpack.c.l.b16 %v201
      %v251 = vunpack.c.l.b16 %v202
      %v252 = vunpack.c.l.b16 %v203
      %v253 = vunpack.c.l.b16 %v204
      %v254 = vunpack.c.l.b16 %v205
      %v255 = vunpack.c.l.b16 %v206
      %v256 = vunpack.c.l.b16 %v207
      %v257 = vunpack.c.l.b16 %v208
      %v258 = vunpack.c.l.b16 %v209
      %v259 = vunpack.c.l.b16 %v210
      %v260 = vunpack.c.l.b16 %v211
      %v261 = vunpack.c.l.b16 %v212
      %v262 = vunpack.c.l.b16 %v213
      %v263 = vunpack.c.l.b16 %v214
      %v264 = vunpack.c.l.b16 %v215
      %v265 = vunpack.c.l.b16 %v216
      %v266 = vunpack.c.l.b16 %v217
      %v267 = vunpack.c.l.b16 %v218
      %v268 = vunpack.c.l.b16 %v219
      %v269 = vunpack.c.l.b16 %v220
      %v270 = vpack.c.b16 %v251, %v250
      %v271 = vpack.c.b16 %v253, %v252
      %v272 = vpack.c.b16 %v255, %v254
      %v273 = vpack.c.b16 %v257, %v256
      %v274 = vpack.c.b16 %v259, %v258
      %v275 = vpack.c.b16 %v261, %v260
      %v276 = vpack.c.b16 %v263, %v262
      %v277 = vpack.c.b16 %v265, %v264
      %v278 = vpack.c.b16 %v267, %v266
      %v279 = vpack.c.b16 %v269, %v268
      %vm290 = vcmask 261120
      %v292 = vsel %vm290, %v228, 0
      %294 = vmatpush.bf16.msra.mxu0 %v277
      %295 = vmatpush.bf16.msra.mxu0 %v276
      %296 = vmatpush.bf16.msra.mxu0 %v275
      %297 = vmatpush.bf16.msra.mxu0 %v274
      %298 = vmatpush.bf16.msra.mxu0 %v273
      %299 = vmatpush.bf16.msra.mxu0 %v272
      %300 = vmatpush.bf16.msra.mxu0 %v271
      %301 = vmatpush.bf16.msra.mxu0 %v270
      %302 = vmatmul.bf16.gmra.mxu0 %v227
      %v303 = vpop.f32.mrf.mxu0
      %v304 = vadd.f32 0.0, %v303
      %v305 = vpop.f32.mrf.mxu0
      %v306 = vadd.f32 0.0, %v305
      %307 = vdwg.mxu0
      %308 = vmatpush.bf16.msra.mxu0 0
      %309 = vmatpush.bf16.msra.mxu0 0
      %310 = vmatpush.bf16.msra.mxu0 0
      %311 = vmatpush.bf16.msra.mxu0 0
      %312 = vmatpush.bf16.msra.mxu0 0
      %313 = vmatpush.bf16.msra.mxu0 0
      %314 = vmatpush.bf16.msra.mxu0 %v279
      %315 = vmatpush.bf16.msra.mxu0 %v278
      %316 = vmatmul.bf16.gmra.mxu0 %v292
      %v317 = vpop.f32.mrf.mxu0
      %v318 = vadd.f32 %v304, %v317
      %v319 = vpop.f32.mrf.mxu0
      %v320 = vadd.f32 %v306, %v319
      %321 = vdwg.mxu0
      %v322 = vld [vmem:[#allocation2] sm:$0xff]
      %v323 = vld [vmem:[#allocation2 + $0x8] sm:$0xff]
      %v324 = vmax.f32 %v322, %v318
      %v325 = vmax.f32 %v323, %v320
      %326 = vst [vmem:[#allocation2] sm:$0xff] %v324
      %327 = vst [vmem:[#allocation2 + $0x8] sm:$0xff] %v325
      %p328 = scmp.eq.s32.totalorder %s19, 3
      // Predicated region
      $region37: #{lenet5_forward.6} parent=31 // pred_check
        %p329 = pneg %p328
      $region38: #{lenet5_forward.6} parent=31 // pred_check_branch
        %331 = sbr.rel (%p329) target = $region40
      $region39: #{lenet5_forward.6} parent=31 // pred_region
        %v332 = vld [vmem:[#allocation2] sm:$0xff]
        %v333 = vld [vmem:[#allocation2 + $0x8] sm:$0xff]
        %v334 = vld [vmem:[%s2] sm:$0xff]
        %v335 = vld [vmem:[%s2 + $0x8] sm:$0xff]
        %337 = vset.pattern.permute.xlu0 0
        %338 = vperm.xlu0 %337, %v334
        %v339 = vpop.permute.xlu0 %338
        %342 = vset.pattern.permute.xlu0 0
        %343 = vperm.xlu0 %342, %v335
        %v344 = vpop.permute.xlu0 %343
        %v346 = vadd.f32 %v332, %v339
        %v347 = vadd.f32 %v333, %v344
        %v348 = vtanh.pop %v346
        %v349 = vtanh.pop %v347
        %350 = vst [vmem:[%s191] sm:$0xff] %v348
        %351 = vst [vmem:[%s191 + $0x8] sm:$0xff] %v349
      $region40: #{lenet5_forward.6} parent=31 // pred_fallthru
        _
      %p352 = scmp.lt.s32.totalorder %s18, 0
      %s353 = scalar_select %p352, %s18, 0
      %s354 = smul.addr %s353, 8
      %s355 = scalar_lea.vmem %s3, %s354
      // Predicated region
      $region41: #{lenet5_forward.6} parent=31 // pred_check
        %p356 = pneg %p114
      $region42: #{lenet5_forward.6} parent=31 // pred_check_branch
        %358 = sbr.rel (%p356) target = $region44
      $region43: #{lenet5_forward.6} parent=31 // pred_region
        _
      $region44: #{lenet5_forward.6} parent=31 // pred_fallthru
        _
      // Predicated region
      $region45: #{lenet5_forward.6} parent=31 // pred_check
        %p359 = pneg %p114
      $region46: #{lenet5_forward.6} parent=31 // pred_check_branch
        %361 = sbr.rel (%p359) target = $region48
      $region47: #{lenet5_forward.6} parent=31 // pred_region
        %p362 = scmp.lt.s32.totalorder %s18, 0
        %s363 = scalar_select %p362, %s18, 0
        %s364 = smul.addr %s363, 8
        %s365 = scalar_lea.vmem %s3, %s364
      $region48: #{lenet5_forward.6} parent=31 // pred_fallthru
        _
    $region32: #{lenet5_forward.6} parent=5 // pred_fallthru
      _
    %p366 = scmp.le.s32.totalorder 2, %s9
    // Predicated region
    $region49: #{lenet5_forward.6} parent=5 // pred_check
      %p367 = pneg %p366
    $region50: #{lenet5_forward.6} parent=5 // pred_check_branch
      %369 = sbr.rel (%p367) target = $region52
    $region51: #{lenet5_forward.6} parent=5 // pred_region
      %s370 = ssub.s32 %s9, 2
    $region52: #{lenet5_forward.6} parent=5 // pred_fallthru
      _
  $region6: #{lenet5_forward.6} parent=0 // loop_footer
    %s13 = sadd.s32 1, %s9
  $region7: #{lenet5_forward.6} parent=0 // loop_footer_branch
    %8 = sbr.rel target = $region3
  $region8: #{lenet5_forward.6} parent=0 // loop_exit
    _

// kernel: lenet5_forward.8
$region0: #{lenet5_forward.8}
  #allocation0 [shape = 'u32[]', space=smem, size = 0x4, offset = 0x4, fixed_abs, tag = 'smem constant byte address 0x4 - core index']
  #allocation1 [shape = 'u32[72,128]{1,0:T(1,128)}', space=vmem, size = 0x9000, scoped, tag = 'internal scratch']
  #allocation2 [shape = 'f32[88,128]{1,0:T(8,128)}', space=vmem, size = 0xb000, scoped, tag = 'scratch operand']
  %s0 = inlined_call_operand.vmem [shape: bf16[1,128,128], index: 0, kind: input, shape index: {}]
  %s1 = inlined_call_operand.vmem [shape: bf16[88,128], index: 1, kind: input, shape index: {}]
  %s2 = inlined_call_operand.vmem [shape: f32[88,1], index: 2, kind: input, shape index: {}]
  %s3 = inlined_call_operand.vmem [shape: f32[88,128], index: 3, kind: output, shape index: {}]
  %s4 = sld [smem:[#allocation0]]
  $region30: #{lenet5_forward.8} parent=0
    _
  %s6 = ssub.s32 1, %s4
  %s7 = scalar_select 0, %s6, %s4
  // Predicated region
  $region2: #{lenet5_forward.8} parent=0 // pred_check
    _
  $region3: #{lenet5_forward.8} parent=0 // pred_check_branch
    %9 = sbr.rel (0) target = $region5
  $region4: #{lenet5_forward.8} parent=0 // pred_region
    _
  $region5: #{lenet5_forward.8} parent=0 // pred_fallthru
    _
  // Predicated region
  $region6: #{lenet5_forward.8} parent=0 // pred_check
    _
  $region7: #{lenet5_forward.8} parent=0 // pred_check_branch
    %11 = sbr.rel (0) target = $region9
  $region8: #{lenet5_forward.8} parent=0 // pred_region
    _
  $region9: #{lenet5_forward.8} parent=0 // pred_fallthru
    _
  // Predicated region
  $region10: #{lenet5_forward.8} parent=0 // pred_check
    _
  $region11: #{lenet5_forward.8} parent=0 // pred_check_branch
    %13 = sbr.rel (0) target = $region13
  $region12: #{lenet5_forward.8} parent=0 // pred_region
    _
  $region13: #{lenet5_forward.8} parent=0 // pred_fallthru
    _
  %p14 = scmp.eq.s32.totalorder 0, 0
  // Predicated region
  $region14: #{lenet5_forward.8} parent=0 // pred_check
    %p15 = pneg %p14
  $region15: #{lenet5_forward.8} parent=0 // pred_check_branch
    %17 = sbr.rel (%p15) target = $region17
  $region16: #{lenet5_forward.8} parent=0 // pred_region
    %18 = vst [vmem:[#allocation2] sm:$0xff] -inf
    %19 = vst [vmem:[#allocation2 + $0x8] sm:$0xff] -inf
    %20 = vst [vmem:[#allocation2 + $0x10] sm:$0xff] -inf
    %21 = vst [vmem:[#allocation2 + $0x18] sm:$0xff] -inf
    %22 = vst [vmem:[#allocation2 + $0x20] sm:$0xff] -inf
    %23 = vst [vmem:[#allocation2 + $0x28] sm:$0xff] -inf
    %24 = vst [vmem:[#allocation2 + $0x30] sm:$0xff] -inf
    %25 = vst [vmem:[#allocation2 + $0x38] sm:$0xff] -inf
    %26 = vst [vmem:[#allocation2 + $0x40] sm:$0xff] -inf
    %27 = vst [vmem:[#allocation2 + $0x48] sm:$0xff] -inf
    %28 = vst [vmem:[#allocation2 + $0x50] sm:$0xff] -inf
  $region17: #{lenet5_forward.8} parent=0 // pred_fallthru
    _
  %v29 = vld [vmem:[%s1] sm:$0xf]
  %v30 = vld [vmem:[%s1 + $0x4] sm:$0xf]
  %v31 = vld [vmem:[%s1 + $0x8] sm:$0xf]
  %v32 = vld [vmem:[%s1 + $0xc] sm:$0xf]
  %v33 = vld [vmem:[%s1 + $0x10] sm:$0xf]
  %v34 = vld [vmem:[%s1 + $0x14] sm:$0xf]
  %v35 = vld [vmem:[%s1 + $0x18] sm:$0xf]
  %v36 = vld [vmem:[%s1 + $0x1c] sm:$0xf]
  %v37 = vld [vmem:[%s1 + $0x20] sm:$0xf]
  %v38 = vld [vmem:[%s1 + $0x24] sm:$0xf]
  %v39 = vld [vmem:[%s1 + $0x28] sm:$0xf]
  %v40 = vld [vmem:[%s0] sm:$0xf]
  %v41 = vld [vmem:[%s0 + $0x4] sm:$0xf]
  %v42 = vld [vmem:[%s0 + $0x8] sm:$0xf]
  %v43 = vld [vmem:[%s0 + $0xc] sm:$0xf]
  %v44 = vld [vmem:[%s0 + $0x10] sm:$0xf]
  %v45 = vld [vmem:[%s0 + $0x14] sm:$0xf]
  %v46 = vld [vmem:[%s0 + $0x18] sm:$0xf]
  %v47 = vld [vmem:[%s0 + $0x1c] sm:$0xf]
  %v48 = vld [vmem:[%s0 + $0x20] sm:$0xf]
  %v49 = vld [vmem:[%s0 + $0x24] sm:$0xf]
  %v50 = vld [vmem:[%s0 + $0x28] sm:$0xf]
  %v51 = vld [vmem:[%s0 + $0x2c] sm:$0xf]
  %v52 = vld [vmem:[%s0 + $0x30] sm:$0xf]
  %v53 = vld [vmem:[%s0 + $0x34] sm:$0xf]
  %v54 = vld [vmem:[%s0 + $0x38] sm:$0xf]
  %v55 = vld [vmem:[%s0 + $0x3c] sm:$0xf]
  %v67 = vunpack.c.l.b16 %v29
  %v68 = vunpack.c.l.b16 %v30
  %v69 = vunpack.c.l.b16 %v31
  %v70 = vunpack.c.l.b16 %v32
  %v71 = vunpack.c.l.b16 %v33
  %v72 = vunpack.c.l.b16 %v34
  %v73 = vunpack.c.l.b16 %v35
  %v74 = vunpack.c.l.b16 %v36
  %v75 = vunpack.c.l.b16 %v37
  %v76 = vunpack.c.l.b16 %v38
  %v77 = vunpack.c.l.b16 %v39
  %v78 = vpack.c.b16 %v68, %v67
  %v79 = vpack.c.b16 %v70, %v69
  %v80 = vpack.c.b16 %v72, %v71
  %v81 = vpack.c.b16 %v74, %v73
  %v82 = vpack.c.b16 %v76, %v75
  %v83 = vpack.c.b16 %v77, %v77
  %v106 = vunpack.c.l.b16 %v40
  %v107 = vunpack.c.l.b16 %v41
  %v108 = vunpack.c.l.b16 %v42
  %v109 = vunpack.c.l.b16 %v43
  %v110 = vunpack.c.l.b16 %v44
  %v111 = vunpack.c.l.b16 %v45
  %v112 = vunpack.c.l.b16 %v46
  %v113 = vunpack.c.l.b16 %v47
  %v114 = vunpack.c.l.b16 %v48
  %v115 = vunpack.c.l.b16 %v49
  %v116 = vunpack.c.l.b16 %v50
  %v117 = vunpack.c.l.b16 %v51
  %v118 = vunpack.c.l.b16 %v52
  %v119 = vunpack.c.l.b16 %v53
  %v120 = vunpack.c.l.b16 %v54
  %v121 = vunpack.c.l.b16 %v55
  %v122 = vpack.c.b16 %v107, %v106
  %v123 = vpack.c.b16 %v109, %v108
  %v124 = vpack.c.b16 %v111, %v110
  %v125 = vpack.c.b16 %v113, %v112
  %v126 = vpack.c.b16 %v115, %v114
  %v127 = vpack.c.b16 %v117, %v116
  %v128 = vpack.c.b16 %v119, %v118
  %v129 = vpack.c.b16 %v121, %v120
  %138 = vmatpush.bf16.msra.mxu0 %v129
  %139 = vmatpush.bf16.msra.mxu0 %v128
  %140 = vmatpush.bf16.msra.mxu0 %v127
  %141 = vmatpush.bf16.msra.mxu0 %v126
  %142 = vmatpush.bf16.msra.mxu0 %v125
  %143 = vmatpush.bf16.msra.mxu0 %v124
  %144 = vmatpush.bf16.msra.mxu0 %v123
  %145 = vmatpush.bf16.msra.mxu0 %v122
  %146 = vmatmul.bf16.gmra.mxu0 %v78
  %v147 = vpop.f32.mrf.mxu0
  %v148 = vadd.f32 0.0, %v147
  %v149 = vpop.f32.mrf.mxu0
  %v150 = vadd.f32 0.0, %v149
  %151 = vmatmul.bf16.gmra.mxu0 %v79
  %v152 = vpop.f32.mrf.mxu0
  %v153 = vadd.f32 0.0, %v152
  %v154 = vpop.f32.mrf.mxu0
  %v155 = vadd.f32 0.0, %v154
  %156 = vmatmul.bf16.gmra.mxu0 %v80
  %v157 = vpop.f32.mrf.mxu0
  %v158 = vadd.f32 0.0, %v157
  %v159 = vpop.f32.mrf.mxu0
  %v160 = vadd.f32 0.0, %v159
  %161 = vmatmul.bf16.gmra.mxu0 %v81
  %v162 = vpop.f32.mrf.mxu0
  %v163 = vadd.f32 0.0, %v162
  %v164 = vpop.f32.mrf.mxu0
  %v165 = vadd.f32 0.0, %v164
  %166 = vmatmul.bf16.gmra.mxu0 %v82
  %v167 = vpop.f32.mrf.mxu0
  %v168 = vadd.f32 0.0, %v167
  %v169 = vpop.f32.mrf.mxu0
  %v170 = vadd.f32 0.0, %v169
  %171 = vmatmul.bf16.gmra.mxu0 %v83
  %v172 = vpop.f32.mrf.mxu0
  %v173 = vadd.f32 0.0, %v172
  %v174 = vpop.f32.mrf.mxu0
  %175 = vdwg.mxu0
  %v176 = vld [vmem:[#allocation2] sm:$0xff]
  %v177 = vld [vmem:[#allocation2 + $0x8] sm:$0xff]
  %v178 = vld [vmem:[#allocation2 + $0x10] sm:$0xff]
  %v179 = vld [vmem:[#allocation2 + $0x18] sm:$0xff]
  %v180 = vld [vmem:[#allocation2 + $0x20] sm:$0xff]
  %v181 = vld [vmem:[#allocation2 + $0x28] sm:$0xff]
  %v182 = vld [vmem:[#allocation2 + $0x30] sm:$0xff]
  %v183 = vld [vmem:[#allocation2 + $0x38] sm:$0xff]
  %v184 = vld [vmem:[#allocation2 + $0x40] sm:$0xff]
  %v185 = vld [vmem:[#allocation2 + $0x48] sm:$0xff]
  %v186 = vld [vmem:[#allocation2 + $0x50] sm:$0xff]
  %v187 = vmax.f32 %v176, %v148
  %v188 = vmax.f32 %v177, %v150
  %v189 = vmax.f32 %v178, %v153
  %v190 = vmax.f32 %v179, %v155
  %v191 = vmax.f32 %v180, %v158
  %v192 = vmax.f32 %v181, %v160
  %v193 = vmax.f32 %v182, %v163
  %v194 = vmax.f32 %v183, %v165
  %v195 = vmax.f32 %v184, %v168
  %v196 = vmax.f32 %v185, %v170
  %v197 = vmax.f32 %v186, %v173
  %198 = vst [vmem:[#allocation2] sm:$0xff] %v187
  %199 = vst [vmem:[#allocation2 + $0x8] sm:$0xff] %v188
  %200 = vst [vmem:[#allocation2 + $0x10] sm:$0xff] %v189
  %201 = vst [vmem:[#allocation2 + $0x18] sm:$0xff] %v190
  %202 = vst [vmem:[#allocation2 + $0x20] sm:$0xff] %v191
  %203 = vst [vmem:[#allocation2 + $0x28] sm:$0xff] %v192
  %204 = vst [vmem:[#allocation2 + $0x30] sm:$0xff] %v193
  %205 = vst [vmem:[#allocation2 + $0x38] sm:$0xff] %v194
  %206 = vst [vmem:[#allocation2 + $0x40] sm:$0xff] %v195
  %207 = vst [vmem:[#allocation2 + $0x48] sm:$0xff] %v196
  %208 = vst [vmem:[#allocation2 + $0x50] sm:$0xff] %v197
  // Predicated region
  $region18: #{lenet5_forward.8} parent=0 // pred_check
    %p209 = pneg %p14
  $region19: #{lenet5_forward.8} parent=0 // pred_check_branch
    %211 = sbr.rel (%p209) target = $region21
  $region20: #{lenet5_forward.8} parent=0 // pred_region
    %v212 = vld [vmem:[#allocation2] sm:$0xff]
    %v213 = vld [vmem:[#allocation2 + $0x8] sm:$0xff]
    %v214 = vld [vmem:[#allocation2 + $0x10] sm:$0xff]
    %v215 = vld [vmem:[#allocation2 + $0x18] sm:$0xff]
    %v216 = vld [vmem:[#allocation2 + $0x20] sm:$0xff]
    %v217 = vld [vmem:[#allocation2 + $0x28] sm:$0xff]
    %v218 = vld [vmem:[#allocation2 + $0x30] sm:$0xff]
    %v219 = vld [vmem:[#allocation2 + $0x38] sm:$0xff]
    %v220 = vld [vmem:[#allocation2 + $0x40] sm:$0xff]
    %v221 = vld [vmem:[#allocation2 + $0x48] sm:$0xff]
    %v222 = vld [vmem:[#allocation2 + $0x50] sm:$0xff]
    %v223 = vld [vmem:[%s2] sm:$0xff]
    %v224 = vld [vmem:[%s2 + $0x8] sm:$0xff]
    %v225 = vld [vmem:[%s2 + $0x10] sm:$0xff]
    %v226 = vld [vmem:[%s2 + $0x18] sm:$0xff]
    %v227 = vld [vmem:[%s2 + $0x20] sm:$0xff]
    %v228 = vld [vmem:[%s2 + $0x28] sm:$0xff]
    %v229 = vld [vmem:[%s2 + $0x30] sm:$0xff]
    %v230 = vld [vmem:[%s2 + $0x38] sm:$0xff]
    %v231 = vld [vmem:[%s2 + $0x40] sm:$0xff]
    %v232 = vld [vmem:[%s2 + $0x48] sm:$0xff]
    %v233 = vld [vmem:[%s2 + $0x50] sm:$0xff]
    %235 = vset.pattern.permute.xlu0 0
    %236 = vperm.xlu0 %235, %v223
    %v237 = vpop.permute.xlu0 %236
    %240 = vset.pattern.permute.xlu0 0
    %241 = vperm.xlu0 %240, %v224
    %v242 = vpop.permute.xlu0 %241
    %245 = vset.pattern.permute.xlu0 0
    %246 = vperm.xlu0 %245, %v225
    %v247 = vpop.permute.xlu0 %246
    %250 = vset.pattern.permute.xlu0 0
    %251 = vperm.xlu0 %250, %v226
    %v252 = vpop.permute.xlu0 %251
    %255 = vset.pattern.permute.xlu0 0
    %256 = vperm.xlu0 %255, %v227
    %v257 = vpop.permute.xlu0 %256
    %260 = vset.pattern.permute.xlu0 0
    %261 = vperm.xlu0 %260, %v228
    %v262 = vpop.permute.xlu0 %261
    %265 = vset.pattern.permute.xlu0 0
    %266 = vperm.xlu0 %265, %v229
    %v267 = vpop.permute.xlu0 %266
    %270 = vset.pattern.permute.xlu0 0
    %271 = vperm.xlu0 %270, %v230
    %v272 = vpop.permute.xlu0 %271
    %275 = vset.pattern.permute.xlu0 0
    %276 = vperm.xlu0 %275, %v231
    %v277 = vpop.permute.xlu0 %276
    %280 = vset.pattern.permute.xlu0 0
    %281 = vperm.xlu0 %280, %v232
    %v282 = vpop.permute.xlu0 %281
    %285 = vset.pattern.permute.xlu0 0
    %286 = vperm.xlu0 %285, %v233
    %v287 = vpop.permute.xlu0 %286
    %v289 = vadd.f32 %v212, %v237
    %v290 = vadd.f32 %v213, %v242
    %v291 = vadd.f32 %v214, %v247
    %v292 = vadd.f32 %v215, %v252
    %v293 = vadd.f32 %v216, %v257
    %v294 = vadd.f32 %v217, %v262
    %v295 = vadd.f32 %v218, %v267
    %v296 = vadd.f32 %v219, %v272
    %v297 = vadd.f32 %v220, %v277
    %v298 = vadd.f32 %v221, %v282
    %v299 = vadd.f32 %v222, %v287
    %v300 = vtanh.pop %v289
    %v301 = vtanh.pop %v290
    %v302 = vtanh.pop %v291
    %v303 = vtanh.pop %v292
    %v304 = vtanh.pop %v293
    %v305 = vtanh.pop %v294
    %v306 = vtanh.pop %v295
    %v307 = vtanh.pop %v296
    %v308 = vtanh.pop %v297
    %v309 = vtanh.pop %v298
    %v310 = vtanh.pop %v299
    %311 = vst [vmem:[%s3] sm:$0xff] %v300
    %312 = vst [vmem:[%s3 + $0x8] sm:$0xff] %v301
    %313 = vst [vmem:[%s3 + $0x10] sm:$0xff] %v302
    %314 = vst [vmem:[%s3 + $0x18] sm:$0xff] %v303
    %315 = vst [vmem:[%s3 + $0x20] sm:$0xff] %v304
    %316 = vst [vmem:[%s3 + $0x28] sm:$0xff] %v305
    %317 = vst [vmem:[%s3 + $0x30] sm:$0xff] %v306
    %318 = vst [vmem:[%s3 + $0x38] sm:$0xff] %v307
    %319 = vst [vmem:[%s3 + $0x40] sm:$0xff] %v308
    %320 = vst [vmem:[%s3 + $0x48] sm:$0xff] %v309
    %321 = vst [vmem:[%s3 + $0x50] sm:$0xff] %v310
  $region21: #{lenet5_forward.8} parent=0 // pred_fallthru
    _
  // Predicated region
  $region22: #{lenet5_forward.8} parent=0 // pred_check
    _
  $region23: #{lenet5_forward.8} parent=0 // pred_check_branch
    %323 = sbr.rel (0) target = $region25
  $region24: #{lenet5_forward.8} parent=0 // pred_region
    _
  $region25: #{lenet5_forward.8} parent=0 // pred_fallthru
    _
  // Predicated region
  $region26: #{lenet5_forward.8} parent=0 // pred_check
    _
  $region27: #{lenet5_forward.8} parent=0 // pred_check_branch
    %325 = sbr.rel (0) target = $region29
  $region28: #{lenet5_forward.8} parent=0 // pred_region
    _
  $region29: #{lenet5_forward.8} parent=0 // pred_fallthru
    _

// kernel: lenet5_forward.7
$region0: #{lenet5_forward.7}
  #allocation0 [shape = 'u32[]', space=smem, size = 0x4, offset = 0x4, fixed_abs, tag = 'smem constant byte address 0x4 - core index']
  #allocation1 [shape = 'u32[72,128]{1,0:T(1,128)}', space=vmem, size = 0x9000, scoped, tag = 'internal scratch']
  #allocation2 [shape = 'f32[120,128]{1,0:T(8,128)}', space=vmem, size = 0xf000, scoped, tag = 'scratch operand']
  %s0 = inlined_call_operand.vmem [shape: bf16[1,400,128], index: 0, kind: input, shape index: {}]
  %s1 = inlined_call_operand.vmem [shape: bf16[120,400], index: 1, kind: input, shape index: {}]
  %s2 = inlined_call_operand.vmem [shape: f32[120,1], index: 2, kind: input, shape index: {}]
  %s3 = inlined_call_operand.vmem [shape: f32[120,128], index: 3, kind: output, shape index: {}]
  %s4 = sld [smem:[#allocation0]]
  $region30: #{lenet5_forward.7} parent=0
    _
  %s6 = ssub.s32 1, %s4
  %s7 = scalar_select 0, %s6, %s4
  // Predicated region
  $region2: #{lenet5_forward.7} parent=0 // pred_check
    _
  $region3: #{lenet5_forward.7} parent=0 // pred_check_branch
    %9 = sbr.rel (0) target = $region5
  $region4: #{lenet5_forward.7} parent=0 // pred_region
    _
  $region5: #{lenet5_forward.7} parent=0 // pred_fallthru
    _
  // Predicated region
  $region6: #{lenet5_forward.7} parent=0 // pred_check
    _
  $region7: #{lenet5_forward.7} parent=0 // pred_check_branch
    %11 = sbr.rel (0) target = $region9
  $region8: #{lenet5_forward.7} parent=0 // pred_region
    _
  $region9: #{lenet5_forward.7} parent=0 // pred_fallthru
    _
  // Predicated region
  $region10: #{lenet5_forward.7} parent=0 // pred_check
    _
  $region11: #{lenet5_forward.7} parent=0 // pred_check_branch
    %13 = sbr.rel (0) target = $region13
  $region12: #{lenet5_forward.7} parent=0 // pred_region
    _
  $region13: #{lenet5_forward.7} parent=0 // pred_fallthru
    _
  %p15 = scmp.eq.s32.totalorder 0, 0
  // Predicated region
  $region14: #{lenet5_forward.7} parent=0 // pred_check
    %p16 = pneg %p15
  $region15: #{lenet5_forward.7} parent=0 // pred_check_branch
    %18 = sbr.rel (%p16) target = $region17
  $region16: #{lenet5_forward.7} parent=0 // pred_region
    %19 = vst [vmem:[#allocation2] sm:$0xff] -inf
    %20 = vst [vmem:[#allocation2 + $0x8] sm:$0xff] -inf
    %21 = vst [vmem:[#allocation2 + $0x10] sm:$0xff] -inf
    %22 = vst [vmem:[#allocation2 + $0x18] sm:$0xff] -inf
    %23 = vst [vmem:[#allocation2 + $0x20] sm:$0xff] -inf
    %24 = vst [vmem:[#allocation2 + $0x28] sm:$0xff] -inf
    %25 = vst [vmem:[#allocation2 + $0x30] sm:$0xff] -inf
    %26 = vst [vmem:[#allocation2 + $0x38] sm:$0xff] -inf
    %27 = vst [vmem:[#allocation2 + $0x40] sm:$0xff] -inf
    %28 = vst [vmem:[#allocation2 + $0x48] sm:$0xff] -inf
    %29 = vst [vmem:[#allocation2 + $0x50] sm:$0xff] -inf
    %30 = vst [vmem:[#allocation2 + $0x58] sm:$0xff] -inf
    %31 = vst [vmem:[#allocation2 + $0x60] sm:$0xff] -inf
    %32 = vst [vmem:[#allocation2 + $0x68] sm:$0xff] -inf
    %33 = vst [vmem:[#allocation2 + $0x70] sm:$0xff] -inf
  $region17: #{lenet5_forward.7} parent=0 // pred_fallthru
    _
  %v34 = vld [vmem:[%s1] sm:$0xff]
  %v35 = vld [vmem:[%s1 + $0x8] sm:$0xff]
  %v36 = vld [vmem:[%s1 + $0x10] sm:$0xff]
  %v37 = vld [vmem:[%s1 + $0x18] sm:$0xff]
  %v38 = vld [vmem:[%s1 + $0x20] sm:$0xff]
  %v39 = vld [vmem:[%s1 + $0x28] sm:$0xff]
  %v40 = vld [vmem:[%s1 + $0x30] sm:$0xff]
  %v41 = vld [vmem:[%s1 + $0x38] sm:$0xff]
  %v42 = vld [vmem:[%s1 + $0x40] sm:$0xff]
  %v43 = vld [vmem:[%s1 + $0x48] sm:$0xff]
  %v44 = vld [vmem:[%s1 + $0x50] sm:$0xff]
  %v45 = vld [vmem:[%s1 + $0x58] sm:$0xff]
  %v46 = vld [vmem:[%s1 + $0x60] sm:$0xff]
  %v47 = vld [vmem:[%s1 + $0x68] sm:$0xff]
  %v48 = vld [vmem:[%s1 + $0x70] sm:$0xff]
  %v49 = vld [vmem:[%s1 + $0x78] sm:$0xff]
  %v50 = vld [vmem:[%s1 + $0x80] sm:$0xff]
  %v51 = vld [vmem:[%s1 + $0x88] sm:$0xff]
  %v52 = vld [vmem:[%s1 + $0x90] sm:$0xff]
  %v53 = vld [vmem:[%s1 + $0x98] sm:$0xff]
  %v54 = vld [vmem:[%s1 + $0xa0] sm:$0xff]
  %v55 = vld [vmem:[%s1 + $0xa8] sm:$0xff]
  %v56 = vld [vmem:[%s1 + $0xb0] sm:$0xff]
  %v57 = vld [vmem:[%s1 + $0xb8] sm:$0xff]
  %v58 = vld [vmem:[%s1 + $0xc0] sm:$0xff]
  %v59 = vld [vmem:[%s1 + $0xc8] sm:$0xff]
  %v60 = vld [vmem:[%s1 + $0xd0] sm:$0xff]
  %v61 = vld [vmem:[%s1 + $0xd8] sm:$0xff]
  %v62 = vld [vmem:[%s1 + $0xe0] sm:$0xff]
  %v63 = vld [vmem:[%s1 + $0xe8] sm:$0xff]
  %v64 = vld [vmem:[%s0] sm:$0xf]
  %v65 = vld [vmem:[%s0 + $0x4] sm:$0xf]
  %v66 = vld [vmem:[%s0 + $0x8] sm:$0xf]
  %v67 = vld [vmem:[%s0 + $0xc] sm:$0xf]
  %v68 = vld [vmem:[%s0 + $0x10] sm:$0xf]
  %v69 = vld [vmem:[%s0 + $0x14] sm:$0xf]
  %v70 = vld [vmem:[%s0 + $0x18] sm:$0xf]
  %v71 = vld [vmem:[%s0 + $0x1c] sm:$0xf]
  %v72 = vld [vmem:[%s0 + $0x20] sm:$0xf]
  %v73 = vld [vmem:[%s0 + $0x24] sm:$0xf]
  %v74 = vld [vmem:[%s0 + $0x28] sm:$0xf]
  %v75 = vld [vmem:[%s0 + $0x2c] sm:$0xf]
  %v76 = vld [vmem:[%s0 + $0x30] sm:$0xf]
  %v77 = vld [vmem:[%s0 + $0x34] sm:$0xf]
  %v78 = vld [vmem:[%s0 + $0x38] sm:$0xf]
  %v79 = vld [vmem:[%s0 + $0x3c] sm:$0xf]
  %v80 = vld [vmem:[%s0 + $0x40] sm:$0xf]
  %v81 = vld [vmem:[%s0 + $0x44] sm:$0xf]
  %v82 = vld [vmem:[%s0 + $0x48] sm:$0xf]
  %v83 = vld [vmem:[%s0 + $0x4c] sm:$0xf]
  %v84 = vld [vmem:[%s0 + $0x50] sm:$0xf]
  %v85 = vld [vmem:[%s0 + $0x54] sm:$0xf]
  %v86 = vld [vmem:[%s0 + $0x58] sm:$0xf]
  %v87 = vld [vmem:[%s0 + $0x5c] sm:$0xf]
  %v88 = vld [vmem:[%s0 + $0x60] sm:$0xf]
  %v89 = vld [vmem:[%s0 + $0x64] sm:$0xf]
  %v90 = vld [vmem:[%s0 + $0x68] sm:$0xf]
  %v91 = vld [vmem:[%s0 + $0x6c] sm:$0xf]
  %v92 = vld [vmem:[%s0 + $0x70] sm:$0xf]
  %v93 = vld [vmem:[%s0 + $0x74] sm:$0xf]
  %v94 = vld [vmem:[%s0 + $0x78] sm:$0xf]
  %v95 = vld [vmem:[%s0 + $0x7c] sm:$0xf]
  %v96 = vld [vmem:[%s0 + $0x80] sm:$0xf]
  %v97 = vld [vmem:[%s0 + $0x84] sm:$0xf]
  %v98 = vld [vmem:[%s0 + $0x88] sm:$0xf]
  %v99 = vld [vmem:[%s0 + $0x8c] sm:$0xf]
  %v100 = vld [vmem:[%s0 + $0x90] sm:$0xf]
  %v101 = vld [vmem:[%s0 + $0x94] sm:$0xf]
  %v102 = vld [vmem:[%s0 + $0x98] sm:$0xf]
  %v103 = vld [vmem:[%s0 + $0x9c] sm:$0xf]
  %v104 = vld [vmem:[%s0 + $0xa0] sm:$0xf]
  %v105 = vld [vmem:[%s0 + $0xa4] sm:$0xf]
  %v106 = vld [vmem:[%s0 + $0xa8] sm:$0xf]
  %v107 = vld [vmem:[%s0 + $0xac] sm:$0xf]
  %v108 = vld [vmem:[%s0 + $0xb0] sm:$0xf]
  %v109 = vld [vmem:[%s0 + $0xb4] sm:$0xf]
  %v110 = vld [vmem:[%s0 + $0xb8] sm:$0xf]
  %v111 = vld [vmem:[%s0 + $0xbc] sm:$0xf]
  %v112 = vld [vmem:[%s0 + $0xc0] sm:$0xf]
  %v113 = vld [vmem:[%s0 + $0xc4] sm:$0xf]
  %v144 = vunpack.c.l.b16 %v34
  %v145 = vunpack.c.h.b16 %v34
  %v146 = vunpack.c.l.b16 %v35
  %v147 = vunpack.c.h.b16 %v35
  %v148 = vunpack.c.l.b16 %v36
  %v149 = vunpack.c.h.b16 %v36
  %v150 = vunpack.c.l.b16 %v37
  %v151 = vunpack.c.h.b16 %v37
  %v152 = vunpack.c.l.b16 %v38
  %v153 = vunpack.c.h.b16 %v38
  %v154 = vunpack.c.l.b16 %v39
  %v155 = vunpack.c.h.b16 %v39
  %v156 = vunpack.c.l.b16 %v40
  %v157 = vunpack.c.h.b16 %v40
  %v158 = vunpack.c.l.b16 %v41
  %v159 = vunpack.c.h.b16 %v41
  %v160 = vunpack.c.l.b16 %v42
  %v161 = vunpack.c.h.b16 %v42
  %v162 = vunpack.c.l.b16 %v43
  %v163 = vunpack.c.h.b16 %v43
  %v164 = vunpack.c.l.b16 %v44
  %v165 = vunpack.c.h.b16 %v44
  %v166 = vunpack.c.l.b16 %v45
  %v167 = vunpack.c.h.b16 %v45
  %v168 = vunpack.c.l.b16 %v46
  %v169 = vunpack.c.h.b16 %v46
  %v170 = vunpack.c.l.b16 %v47
  %v171 = vunpack.c.h.b16 %v47
  %v172 = vunpack.c.l.b16 %v48
  %v173 = vunpack.c.h.b16 %v48
  %v174 = vunpack.c.l.b16 %v49
  %v175 = vunpack.c.h.b16 %v49
  %v176 = vunpack.c.l.b16 %v50
  %v177 = vunpack.c.h.b16 %v50
  %v178 = vunpack.c.l.b16 %v51
  %v179 = vunpack.c.h.b16 %v51
  %v180 = vunpack.c.l.b16 %v52
  %v181 = vunpack.c.h.b16 %v52
  %v182 = vunpack.c.l.b16 %v53
  %v183 = vunpack.c.h.b16 %v53
  %v184 = vunpack.c.l.b16 %v54
  %v185 = vunpack.c.h.b16 %v54
  %v186 = vunpack.c.l.b16 %v55
  %v187 = vunpack.c.h.b16 %v55
  %v188 = vunpack.c.l.b16 %v56
  %v189 = vunpack.c.h.b16 %v56
  %v190 = vunpack.c.l.b16 %v57
  %v191 = vunpack.c.h.b16 %v57
  %v192 = vunpack.c.l.b16 %v58
  %v193 = vunpack.c.h.b16 %v58
  %v194 = vunpack.c.l.b16 %v59
  %v195 = vunpack.c.h.b16 %v59
  %v196 = vunpack.c.l.b16 %v60
  %v197 = vunpack.c.h.b16 %v60
  %v198 = vunpack.c.l.b16 %v61
  %v199 = vunpack.c.h.b16 %v61
  %v200 = vunpack.c.l.b16 %v62
  %v201 = vunpack.c.h.b16 %v62
  %v202 = vunpack.c.l.b16 %v63
  %v203 = vunpack.c.h.b16 %v63
  %v204 = vpack.c.b16 %v148, %v144
  %v205 = vpack.c.b16 %v149, %v145
  %v206 = vpack.c.b16 %v150, %v146
  %v207 = vpack.c.b16 %v151, %v147
  %v208 = vpack.c.b16 %v156, %v152
  %v209 = vpack.c.b16 %v157, %v153
  %v210 = vpack.c.b16 %v158, %v154
  %v211 = vpack.c.b16 %v159, %v155
  %v212 = vpack.c.b16 %v164, %v160
  %v213 = vpack.c.b16 %v165, %v161
  %v214 = vpack.c.b16 %v166, %v162
  %v215 = vpack.c.b16 %v167, %v163
  %v216 = vpack.c.b16 %v172, %v168
  %v217 = vpack.c.b16 %v173, %v169
  %v218 = vpack.c.b16 %v174, %v170
  %v219 = vpack.c.b16 %v175, %v171
  %v220 = vpack.c.b16 %v180, %v176
  %v221 = vpack.c.b16 %v181, %v177
  %v222 = vpack.c.b16 %v182, %v178
  %v223 = vpack.c.b16 %v183, %v179
  %v224 = vpack.c.b16 %v188, %v184
  %v225 = vpack.c.b16 %v189, %v185
  %v226 = vpack.c.b16 %v190, %v186
  %v227 = vpack.c.b16 %v191, %v187
  %v228 = vpack.c.b16 %v196, %v192
  %v229 = vpack.c.b16 %v197, %v193
  %v230 = vpack.c.b16 %v198, %v194
  %v231 = vpack.c.b16 %v199, %v195
  %v232 = vpack.c.b16 %v200, %v200
  %v233 = vpack.c.b16 %v201, %v201
  %v234 = vpack.c.b16 %v202, %v202
  %v235 = vpack.c.b16 %v203, %v203
  %v310 = vunpack.c.l.b16 %v64
  %v311 = vunpack.c.l.b16 %v65
  %v312 = vunpack.c.l.b16 %v66
  %v313 = vunpack.c.l.b16 %v67
  %v314 = vunpack.c.l.b16 %v68
  %v315 = vunpack.c.l.b16 %v69
  %v316 = vunpack.c.l.b16 %v70
  %v317 = vunpack.c.l.b16 %v71
  %v318 = vunpack.c.l.b16 %v72
  %v319 = vunpack.c.l.b16 %v73
  %v320 = vunpack.c.l.b16 %v74
  %v321 = vunpack.c.l.b16 %v75
  %v322 = vunpack.c.l.b16 %v76
  %v323 = vunpack.c.l.b16 %v77
  %v324 = vunpack.c.l.b16 %v78
  %v325 = vunpack.c.l.b16 %v79
  %v326 = vunpack.c.l.b16 %v80
  %v327 = vunpack.c.l.b16 %v81
  %v328 = vunpack.c.l.b16 %v82
  %v329 = vunpack.c.l.b16 %v83
  %v330 = vunpack.c.l.b16 %v84
  %v331 = vunpack.c.l.b16 %v85
  %v332 = vunpack.c.l.b16 %v86
  %v333 = vunpack.c.l.b16 %v87
  %v334 = vunpack.c.l.b16 %v88
  %v335 = vunpack.c.l.b16 %v89
  %v336 = vunpack.c.l.b16 %v90
  %v337 = vunpack.c.l.b16 %v91
  %v338 = vunpack.c.l.b16 %v92
  %v339 = vunpack.c.l.b16 %v93
  %v340 = vunpack.c.l.b16 %v94
  %v341 = vunpack.c.l.b16 %v95
  %v342 = vunpack.c.l.b16 %v96
  %v343 = vunpack.c.l.b16 %v97
  %v344 = vunpack.c.l.b16 %v98
  %v345 = vunpack.c.l.b16 %v99
  %v346 = vunpack.c.l.b16 %v100
  %v347 = vunpack.c.l.b16 %v101
  %v348 = vunpack.c.l.b16 %v102
  %v349 = vunpack.c.l.b16 %v103
  %v350 = vunpack.c.l.b16 %v104
  %v351 = vunpack.c.l.b16 %v105
  %v352 = vunpack.c.l.b16 %v106
  %v353 = vunpack.c.l.b16 %v107
  %v354 = vunpack.c.l.b16 %v108
  %v355 = vunpack.c.l.b16 %v109
  %v356 = vunpack.c.l.b16 %v110
  %v357 = vunpack.c.l.b16 %v111
  %v358 = vunpack.c.l.b16 %v112
  %v359 = vunpack.c.l.b16 %v113
  %v360 = vpack.c.b16 %v311, %v310
  %v361 = vpack.c.b16 %v313, %v312
  %v362 = vpack.c.b16 %v315, %v314
  %v363 = vpack.c.b16 %v317, %v316
  %v364 = vpack.c.b16 %v319, %v318
  %v365 = vpack.c.b16 %v321, %v320
  %v366 = vpack.c.b16 %v323, %v322
  %v367 = vpack.c.b16 %v325, %v324
  %v368 = vpack.c.b16 %v327, %v326
  %v369 = vpack.c.b16 %v329, %v328
  %v370 = vpack.c.b16 %v331, %v330
  %v371 = vpack.c.b16 %v333, %v332
  %v372 = vpack.c.b16 %v335, %v334
  %v373 = vpack.c.b16 %v337, %v336
  %v374 = vpack.c.b16 %v339, %v338
  %v375 = vpack.c.b16 %v341, %v340
  %v376 = vpack.c.b16 %v343, %v342
  %v377 = vpack.c.b16 %v345, %v344
  %v378 = vpack.c.b16 %v347, %v346
  %v379 = vpack.c.b16 %v349, %v348
  %v380 = vpack.c.b16 %v351, %v350
  %v381 = vpack.c.b16 %v353, %v352
  %v382 = vpack.c.b16 %v355, %v354
  %v383 = vpack.c.b16 %v357, %v356
  %v384 = vpack.c.b16 %v359, %v358
  %vm410 = vcmask 130048
  %v412 = vsel %vm410, %v207, 0
  %v415 = vsel %vm410, %v211, 0
  %v418 = vsel %vm410, %v215, 0
  %v421 = vsel %vm410, %v219, 0
  %v424 = vsel %vm410, %v223, 0
  %v427 = vsel %vm410, %v227, 0
  %v430 = vsel %vm410, %v231, 0
  %v433 = vsel %vm410, %v235, 0
  %435 = vmatpush.bf16.msra.mxu0 %v367
  %436 = vmatpush.bf16.msra.mxu0 %v366
  %437 = vmatpush.bf16.msra.mxu0 %v365
  %438 = vmatpush.bf16.msra.mxu0 %v364
  %439 = vmatpush.bf16.msra.mxu0 %v363
  %440 = vmatpush.bf16.msra.mxu0 %v362
  %441 = vmatpush.bf16.msra.mxu0 %v361
  %442 = vmatpush.bf16.msra.mxu0 %v360
  %443 = vmatmul.bf16.gmra.mxu0 %v204
  %v444 = vpop.f32.mrf.mxu0
  %v445 = vadd.f32 0.0, %v444
  %v446 = vpop.f32.mrf.mxu0
  %v447 = vadd.f32 0.0, %v446
  %448 = vmatmul.bf16.gmra.mxu0 %v208
  %v449 = vpop.f32.mrf.mxu0
  %v450 = vadd.f32 0.0, %v449
  %v451 = vpop.f32.mrf.mxu0
  %v452 = vadd.f32 0.0, %v451
  %453 = vmatmul.bf16.gmra.mxu0 %v212
  %v454 = vpop.f32.mrf.mxu0
  %v455 = vadd.f32 0.0, %v454
  %v456 = vpop.f32.mrf.mxu0
  %v457 = vadd.f32 0.0, %v456
  %458 = vmatmul.bf16.gmra.mxu0 %v216
  %v459 = vpop.f32.mrf.mxu0
  %v460 = vadd.f32 0.0, %v459
  %v461 = vpop.f32.mrf.mxu0
  %v462 = vadd.f32 0.0, %v461
  %463 = vmatmul.bf16.gmra.mxu0 %v220
  %v464 = vpop.f32.mrf.mxu0
  %v465 = vadd.f32 0.0, %v464
  %v466 = vpop.f32.mrf.mxu0
  %v467 = vadd.f32 0.0, %v466
  %468 = vmatmul.bf16.gmra.mxu0 %v224
  %v469 = vpop.f32.mrf.mxu0
  %v470 = vadd.f32 0.0, %v469
  %v471 = vpop.f32.mrf.mxu0
  %v472 = vadd.f32 0.0, %v471
  %473 = vmatmul.bf16.gmra.mxu0 %v228
  %v474 = vpop.f32.mrf.mxu0
  %v475 = vadd.f32 0.0, %v474
  %v476 = vpop.f32.mrf.mxu0
  %v477 = vadd.f32 0.0, %v476
  %478 = vmatmul.bf16.gmra.mxu0 %v232
  %v479 = vpop.f32.mrf.mxu0
  %v480 = vadd.f32 0.0, %v479
  %v481 = vpop.f32.mrf.mxu0
  %482 = vdwg.mxu0
  %483 = vmatpush.bf16.msra.mxu0 %v375
  %484 = vmatpush.bf16.msra.mxu0 %v374
  %485 = vmatpush.bf16.msra.mxu0 %v373
  %486 = vmatpush.bf16.msra.mxu0 %v372
  %487 = vmatpush.bf16.msra.mxu0 %v371
  %488 = vmatpush.bf16.msra.mxu0 %v370
  %489 = vmatpush.bf16.msra.mxu0 %v369
  %490 = vmatpush.bf16.msra.mxu0 %v368
  %491 = vmatmul.bf16.gmra.mxu0 %v205
  %v492 = vpop.f32.mrf.mxu0
  %v493 = vadd.f32 %v445, %v492
  %v494 = vpop.f32.mrf.mxu0
  %v495 = vadd.f32 %v447, %v494
  %496 = vmatmul.bf16.gmra.mxu0 %v209
  %v497 = vpop.f32.mrf.mxu0
  %v498 = vadd.f32 %v450, %v497
  %v499 = vpop.f32.mrf.mxu0
  %v500 = vadd.f32 %v452, %v499
  %501 = vmatmul.bf16.gmra.mxu0 %v213
  %v502 = vpop.f32.mrf.mxu0
  %v503 = vadd.f32 %v455, %v502
  %v504 = vpop.f32.mrf.mxu0
  %v505 = vadd.f32 %v457, %v504
  %506 = vmatmul.bf16.gmra.mxu0 %v217
  %v507 = vpop.f32.mrf.mxu0
  %v508 = vadd.f32 %v460, %v507
  %v509 = vpop.f32.mrf.mxu0
  %v510 = vadd.f32 %v462, %v509
  %511 = vmatmul.bf16.gmra.mxu0 %v221
  %v512 = vpop.f32.mrf.mxu0
  %v513 = vadd.f32 %v465, %v512
  %v514 = vpop.f32.mrf.mxu0
  %v515 = vadd.f32 %v467, %v514
  %516 = vmatmul.bf16.gmra.mxu0 %v225
  %v517 = vpop.f32.mrf.mxu0
  %v518 = vadd.f32 %v470, %v517
  %v519 = vpop.f32.mrf.mxu0
  %v520 = vadd.f32 %v472, %v519
  %521 = vmatmul.bf16.gmra.mxu0 %v229
  %v522 = vpop.f32.mrf.mxu0
  %v523 = vadd.f32 %v475, %v522
  %v524 = vpop.f32.mrf.mxu0
  %v525 = vadd.f32 %v477, %v524
  %526 = vmatmul.bf16.gmra.mxu0 %v233
  %v527 = vpop.f32.mrf.mxu0
  %v528 = vadd.f32 %v480, %v527
  %v529 = vpop.f32.mrf.mxu0
  %530 = vdwg.mxu0
  %531 = vmatpush.bf16.msra.mxu0 %v383
  %532 = vmatpush.bf16.msra.mxu0 %v382
  %533 = vmatpush.bf16.msra.mxu0 %v381
  %534 = vmatpush.bf16.msra.mxu0 %v380
  %535 = vmatpush.bf16.msra.mxu0 %v379
  %536 = vmatpush.bf16.msra.mxu0 %v378
  %537 = vmatpush.bf16.msra.mxu0 %v377
  %538 = vmatpush.bf16.msra.mxu0 %v376
  %539 = vmatmul.bf16.gmra.mxu0 %v206
  %v540 = vpop.f32.mrf.mxu0
  %v541 = vadd.f32 %v493, %v540
  %v542 = vpop.f32.mrf.mxu0
  %v543 = vadd.f32 %v495, %v542
  %544 = vmatmul.bf16.gmra.mxu0 %v210
  %v545 = vpop.f32.mrf.mxu0
  %v546 = vadd.f32 %v498, %v545
  %v547 = vpop.f32.mrf.mxu0
  %v548 = vadd.f32 %v500, %v547
  %549 = vmatmul.bf16.gmra.mxu0 %v214
  %v550 = vpop.f32.mrf.mxu0
  %v551 = vadd.f32 %v503, %v550
  %v552 = vpop.f32.mrf.mxu0
  %v553 = vadd.f32 %v505, %v552
  %554 = vmatmul.bf16.gmra.mxu0 %v218
  %v555 = vpop.f32.mrf.mxu0
  %v556 = vadd.f32 %v508, %v555
  %v557 = vpop.f32.mrf.mxu0
  %v558 = vadd.f32 %v510, %v557
  %559 = vmatmul.bf16.gmra.mxu0 %v222
  %v560 = vpop.f32.mrf.mxu0
  %v561 = vadd.f32 %v513, %v560
  %v562 = vpop.f32.mrf.mxu0
  %v563 = vadd.f32 %v515, %v562
  %564 = vmatmul.bf16.gmra.mxu0 %v226
  %v565 = vpop.f32.mrf.mxu0
  %v566 = vadd.f32 %v518, %v565
  %v567 = vpop.f32.mrf.mxu0
  %v568 = vadd.f32 %v520, %v567
  %569 = vmatmul.bf16.gmra.mxu0 %v230
  %v570 = vpop.f32.mrf.mxu0
  %v571 = vadd.f32 %v523, %v570
  %v572 = vpop.f32.mrf.mxu0
  %v573 = vadd.f32 %v525, %v572
  %574 = vmatmul.bf16.gmra.mxu0 %v234
  %v575 = vpop.f32.mrf.mxu0
  %v576 = vadd.f32 %v528, %v575
  %v577 = vpop.f32.mrf.mxu0
  %578 = vdwg.mxu0
  %579 = vmatpush.bf16.msra.mxu0 0
  %580 = vmatpush.bf16.msra.mxu0 0
  %581 = vmatpush.bf16.msra.mxu0 0
  %582 = vmatpush.bf16.msra.mxu0 0
  %583 = vmatpush.bf16.msra.mxu0 0
  %584 = vmatpush.bf16.msra.mxu0 0
  %585 = vmatpush.bf16.msra.mxu0 0
  %586 = vmatpush.bf16.msra.mxu0 %v384
  %587 = vmatmul.bf16.gmra.mxu0 %v412
  %v588 = vpop.f32.mrf.mxu0
  %v589 = vadd.f32 %v541, %v588
  %v590 = vpop.f32.mrf.mxu0
  %v591 = vadd.f32 %v543, %v590
  %592 = vmatmul.bf16.gmra.mxu0 %v415
  %v593 = vpop.f32.mrf.mxu0
  %v594 = vadd.f32 %v546, %v593
  %v595 = vpop.f32.mrf.mxu0
  %v596 = vadd.f32 %v548, %v595
  %597 = vmatmul.bf16.gmra.mxu0 %v418
  %v598 = vpop.f32.mrf.mxu0
  %v599 = vadd.f32 %v551, %v598
  %v600 = vpop.f32.mrf.mxu0
  %v601 = vadd.f32 %v553, %v600
  %602 = vmatmul.bf16.gmra.mxu0 %v421
  %v603 = vpop.f32.mrf.mxu0
  %v604 = vadd.f32 %v556, %v603
  %v605 = vpop.f32.mrf.mxu0
  %v606 = vadd.f32 %v558, %v605
  %607 = vmatmul.bf16.gmra.mxu0 %v424
  %v608 = vpop.f32.mrf.mxu0
  %v609 = vadd.f32 %v561, %v608
  %v610 = vpop.f32.mrf.mxu0
  %v611 = vadd.f32 %v563, %v610
  %612 = vmatmul.bf16.gmra.mxu0 %v427
  %v613 = vpop.f32.mrf.mxu0
  %v614 = vadd.f32 %v566, %v613
  %v615 = vpop.f32.mrf.mxu0
  %v616 = vadd.f32 %v568, %v615
  %617 = vmatmul.bf16.gmra.mxu0 %v430
  %v618 = vpop.f32.mrf.mxu0
  %v619 = vadd.f32 %v571, %v618
  %v620 = vpop.f32.mrf.mxu0
  %v621 = vadd.f32 %v573, %v620
  %622 = vmatmul.bf16.gmra.mxu0 %v433
  %v623 = vpop.f32.mrf.mxu0
  %v624 = vadd.f32 %v576, %v623
  %v625 = vpop.f32.mrf.mxu0
  %626 = vdwg.mxu0
  %v627 = vld [vmem:[#allocation2] sm:$0xff]
  %v628 = vld [vmem:[#allocation2 + $0x8] sm:$0xff]
  %v629 = vld [vmem:[#allocation2 + $0x10] sm:$0xff]
  %v630 = vld [vmem:[#allocation2 + $0x18] sm:$0xff]
  %v631 = vld [vmem:[#allocation2 + $0x20] sm:$0xff]
  %v632 = vld [vmem:[#allocation2 + $0x28] sm:$0xff]
  %v633 = vld [vmem:[#allocation2 + $0x30] sm:$0xff]
  %v634 = vld [vmem:[#allocation2 + $0x38] sm:$0xff]
  %v635 = vld [vmem:[#allocation2 + $0x40] sm:$0xff]
  %v636 = vld [vmem:[#allocation2 + $0x48] sm:$0xff]
  %v637 = vld [vmem:[#allocation2 + $0x50] sm:$0xff]
  %v638 = vld [vmem:[#allocation2 + $0x58] sm:$0xff]
  %v639 = vld [vmem:[#allocation2 + $0x60] sm:$0xff]
  %v640 = vld [vmem:[#allocation2 + $0x68] sm:$0xff]
  %v641 = vld [vmem:[#allocation2 + $0x70] sm:$0xff]
  %v642 = vmax.f32 %v627, %v589
  %v643 = vmax.f32 %v628, %v591
  %v644 = vmax.f32 %v629, %v594
  %v645 = vmax.f32 %v630, %v596
  %v646 = vmax.f32 %v631, %v599
  %v647 = vmax.f32 %v632, %v601
  %v648 = vmax.f32 %v633, %v604
  %v649 = vmax.f32 %v634, %v606
  %v650 = vmax.f32 %v635, %v609
  %v651 = vmax.f32 %v636, %v611
  %v652 = vmax.f32 %v637, %v614
  %v653 = vmax.f32 %v638, %v616
  %v654 = vmax.f32 %v639, %v619
  %v655 = vmax.f32 %v640, %v621
  %v656 = vmax.f32 %v641, %v624
  %657 = vst [vmem:[#allocation2] sm:$0xff] %v642
  %658 = vst [vmem:[#allocation2 + $0x8] sm:$0xff] %v643
  %659 = vst [vmem:[#allocation2 + $0x10] sm:$0xff] %v644
  %660 = vst [vmem:[#allocation2 + $0x18] sm:$0xff] %v645
  %661 = vst [vmem:[#allocation2 + $0x20] sm:$0xff] %v646
  %662 = vst [vmem:[#allocation2 + $0x28] sm:$0xff] %v647
  %663 = vst [vmem:[#allocation2 + $0x30] sm:$0xff] %v648
  %664 = vst [vmem:[#allocation2 + $0x38] sm:$0xff] %v649
  %665 = vst [vmem:[#allocation2 + $0x40] sm:$0xff] %v650
  %666 = vst [vmem:[#allocation2 + $0x48] sm:$0xff] %v651
  %667 = vst [vmem:[#allocation2 + $0x50] sm:$0xff] %v652
  %668 = vst [vmem:[#allocation2 + $0x58] sm:$0xff] %v653
  %669 = vst [vmem:[#allocation2 + $0x60] sm:$0xff] %v654
  %670 = vst [vmem:[#allocation2 + $0x68] sm:$0xff] %v655
  %671 = vst [vmem:[#allocation2 + $0x70] sm:$0xff] %v656
  // Predicated region
  $region18: #{lenet5_forward.7} parent=0 // pred_check
    %p672 = pneg %p15
  $region19: #{lenet5_forward.7} parent=0 // pred_check_branch
    %674 = sbr.rel (%p672) target = $region21
  $region20: #{lenet5_forward.7} parent=0 // pred_region
    %v675 = vld [vmem:[#allocation2] sm:$0xff]
    %v676 = vld [vmem:[#allocation2 + $0x8] sm:$0xff]
    %v677 = vld [vmem:[#allocation2 + $0x10] sm:$0xff]
    %v678 = vld [vmem:[#allocation2 + $0x18] sm:$0xff]
    %v679 = vld [vmem:[#allocation2 + $0x20] sm:$0xff]
    %v680 = vld [vmem:[#allocation2 + $0x28] sm:$0xff]
    %v681 = vld [vmem:[#allocation2 + $0x30] sm:$0xff]
    %v682 = vld [vmem:[#allocation2 + $0x38] sm:$0xff]
    %v683 = vld [vmem:[#allocation2 + $0x40] sm:$0xff]
    %v684 = vld [vmem:[#allocation2 + $0x48] sm:$0xff]
    %v685 = vld [vmem:[#allocation2 + $0x50] sm:$0xff]
    %v686 = vld [vmem:[#allocation2 + $0x58] sm:$0xff]
    %v687 = vld [vmem:[#allocation2 + $0x60] sm:$0xff]
    %v688 = vld [vmem:[#allocation2 + $0x68] sm:$0xff]
    %v689 = vld [vmem:[#allocation2 + $0x70] sm:$0xff]
    %v690 = vld [vmem:[%s2] sm:$0xff]
    %v691 = vld [vmem:[%s2 + $0x8] sm:$0xff]
    %v692 = vld [vmem:[%s2 + $0x10] sm:$0xff]
    %v693 = vld [vmem:[%s2 + $0x18] sm:$0xff]
    %v694 = vld [vmem:[%s2 + $0x20] sm:$0xff]
    %v695 = vld [vmem:[%s2 + $0x28] sm:$0xff]
    %v696 = vld [vmem:[%s2 + $0x30] sm:$0xff]
    %v697 = vld [vmem:[%s2 + $0x38] sm:$0xff]
    %v698 = vld [vmem:[%s2 + $0x40] sm:$0xff]
    %v699 = vld [vmem:[%s2 + $0x48] sm:$0xff]
    %v700 = vld [vmem:[%s2 + $0x50] sm:$0xff]
    %v701 = vld [vmem:[%s2 + $0x58] sm:$0xff]
    %v702 = vld [vmem:[%s2 + $0x60] sm:$0xff]
    %v703 = vld [vmem:[%s2 + $0x68] sm:$0xff]
    %v704 = vld [vmem:[%s2 + $0x70] sm:$0xff]
    %706 = vset.pattern.permute.xlu0 0
    %707 = vperm.xlu0 %706, %v690
    %v708 = vpop.permute.xlu0 %707
    %711 = vset.pattern.permute.xlu0 0
    %712 = vperm.xlu0 %711, %v691
    %v713 = vpop.permute.xlu0 %712
    %716 = vset.pattern.permute.xlu0 0
    %717 = vperm.xlu0 %716, %v692
    %v718 = vpop.permute.xlu0 %717
    %721 = vset.pattern.permute.xlu0 0
    %722 = vperm.xlu0 %721, %v693
    %v723 = vpop.permute.xlu0 %722
    %726 = vset.pattern.permute.xlu0 0
    %727 = vperm.xlu0 %726, %v694
    %v728 = vpop.permute.xlu0 %727
    %731 = vset.pattern.permute.xlu0 0
    %732 = vperm.xlu0 %731, %v695
    %v733 = vpop.permute.xlu0 %732
    %736 = vset.pattern.permute.xlu0 0
    %737 = vperm.xlu0 %736, %v696
    %v738 = vpop.permute.xlu0 %737
    %741 = vset.pattern.permute.xlu0 0
    %742 = vperm.xlu0 %741, %v697
    %v743 = vpop.permute.xlu0 %742
    %746 = vset.pattern.permute.xlu0 0
    %747 = vperm.xlu0 %746, %v698
    %v748 = vpop.permute.xlu0 %747
    %751 = vset.pattern.permute.xlu0 0
    %752 = vperm.xlu0 %751, %v699
    %v753 = vpop.permute.xlu0 %752
    %756 = vset.pattern.permute.xlu0 0
    %757 = vperm.xlu0 %756, %v700
    %v758 = vpop.permute.xlu0 %757
    %761 = vset.pattern.permute.xlu0 0
    %762 = vperm.xlu0 %761, %v701
    %v763 = vpop.permute.xlu0 %762
    %766 = vset.pattern.permute.xlu0 0
    %767 = vperm.xlu0 %766, %v702
    %v768 = vpop.permute.xlu0 %767
    %771 = vset.pattern.permute.xlu0 0
    %772 = vperm.xlu0 %771, %v703
    %v773 = vpop.permute.xlu0 %772
    %776 = vset.pattern.permute.xlu0 0
    %777 = vperm.xlu0 %776, %v704
    %v778 = vpop.permute.xlu0 %777
    %v780 = vadd.f32 %v675, %v708
    %v781 = vadd.f32 %v676, %v713
    %v782 = vadd.f32 %v677, %v718
    %v783 = vadd.f32 %v678, %v723
    %v784 = vadd.f32 %v679, %v728
    %v785 = vadd.f32 %v680, %v733
    %v786 = vadd.f32 %v681, %v738
    %v787 = vadd.f32 %v682, %v743
    %v788 = vadd.f32 %v683, %v748
    %v789 = vadd.f32 %v684, %v753
    %v790 = vadd.f32 %v685, %v758
    %v791 = vadd.f32 %v686, %v763
    %v792 = vadd.f32 %v687, %v768
    %v793 = vadd.f32 %v688, %v773
    %v794 = vadd.f32 %v689, %v778
    %v795 = vtanh.pop %v780
    %v796 = vtanh.pop %v781
    %v797 = vtanh.pop %v782
    %v798 = vtanh.pop %v783
    %v799 = vtanh.pop %v784
    %v800 = vtanh.pop %v785
    %v801 = vtanh.pop %v786
    %v802 = vtanh.pop %v787
    %v803 = vtanh.pop %v788
    %v804 = vtanh.pop %v789
    %v805 = vtanh.pop %v790
    %v806 = vtanh.pop %v791
    %v807 = vtanh.pop %v792
    %v808 = vtanh.pop %v793
    %v809 = vtanh.pop %v794
    %810 = vst [vmem:[%s3] sm:$0xff] %v795
    %811 = vst [vmem:[%s3 + $0x8] sm:$0xff] %v796
    %812 = vst [vmem:[%s3 + $0x10] sm:$0xff] %v797
    %813 = vst [vmem:[%s3 + $0x18] sm:$0xff] %v798
    %814 = vst [vmem:[%s3 + $0x20] sm:$0xff] %v799
    %815 = vst [vmem:[%s3 + $0x28] sm:$0xff] %v800
    %816 = vst [vmem:[%s3 + $0x30] sm:$0xff] %v801
    %817 = vst [vmem:[%s3 + $0x38] sm:$0xff] %v802
    %818 = vst [vmem:[%s3 + $0x40] sm:$0xff] %v803
    %819 = vst [vmem:[%s3 + $0x48] sm:$0xff] %v804
    %820 = vst [vmem:[%s3 + $0x50] sm:$0xff] %v805
    %821 = vst [vmem:[%s3 + $0x58] sm:$0xff] %v806
    %822 = vst [vmem:[%s3 + $0x60] sm:$0xff] %v807
    %823 = vst [vmem:[%s3 + $0x68] sm:$0xff] %v808
    %824 = vst [vmem:[%s3 + $0x70] sm:$0xff] %v809
  $region21: #{lenet5_forward.7} parent=0 // pred_fallthru
    _
  // Predicated region
  $region22: #{lenet5_forward.7} parent=0 // pred_check
    _
  $region23: #{lenet5_forward.7} parent=0 // pred_check_branch
    %826 = sbr.rel (0) target = $region25
  $region24: #{lenet5_forward.7} parent=0 // pred_region
    _
  $region25: #{lenet5_forward.7} parent=0 // pred_fallthru
    _
  // Predicated region
  $region26: #{lenet5_forward.7} parent=0 // pred_check
    _
  $region27: #{lenet5_forward.7} parent=0 // pred_check_branch
    %828 = sbr.rel (0) target = $region29
  $region28: #{lenet5_forward.7} parent=0 // pred_region
    _
  $region29: #{lenet5_forward.7} parent=0 // pred_fallthru
    _

// kernel: lenet5_forward.9
$region0: #{lenet5_forward.9}
  #allocation0 [shape = 'u32[]', space=smem, size = 0x4, offset = 0x4, fixed_abs, tag = 'smem constant byte address 0x4 - core index']
  #allocation1 [shape = 'u32[72,128]{1,0:T(1,128)}', space=vmem, size = 0x9000, scoped, tag = 'internal scratch']
  #allocation2 [shape = 'f32[16,128]{1,0:T(8,128)}', space=vmem, size = 0x2000, scoped, tag = 'scratch operand']
  %s0 = inlined_call_operand.vmem [shape: bf16[1,96,128], index: 0, kind: input, shape index: {}]
  %s1 = inlined_call_operand.vmem [shape: bf16[16,96], index: 1, kind: input, shape index: {}]
  %s2 = inlined_call_operand.vmem [shape: f32[16,1], index: 2, kind: input, shape index: {}]
  %s3 = inlined_call_operand.vmem [shape: f32[16,128], index: 3, kind: output, shape index: {}]
  %s4 = sld [smem:[#allocation0]]
  $region30: #{lenet5_forward.9} parent=0
    _
  %s6 = ssub.s32 1, %s4
  %s7 = scalar_select 0, %s6, %s4
  // Predicated region
  $region2: #{lenet5_forward.9} parent=0 // pred_check
    _
  $region3: #{lenet5_forward.9} parent=0 // pred_check_branch
    %9 = sbr.rel (0) target = $region5
  $region4: #{lenet5_forward.9} parent=0 // pred_region
    _
  $region5: #{lenet5_forward.9} parent=0 // pred_fallthru
    _
  // Predicated region
  $region6: #{lenet5_forward.9} parent=0 // pred_check
    _
  $region7: #{lenet5_forward.9} parent=0 // pred_check_branch
    %11 = sbr.rel (0) target = $region9
  $region8: #{lenet5_forward.9} parent=0 // pred_region
    _
  $region9: #{lenet5_forward.9} parent=0 // pred_fallthru
    _
  // Predicated region
  $region10: #{lenet5_forward.9} parent=0 // pred_check
    _
  $region11: #{lenet5_forward.9} parent=0 // pred_check_branch
    %13 = sbr.rel (0) target = $region13
  $region12: #{lenet5_forward.9} parent=0 // pred_region
    _
  $region13: #{lenet5_forward.9} parent=0 // pred_fallthru
    _
  %p15 = scmp.eq.s32.totalorder 0, 0
  // Predicated region
  $region14: #{lenet5_forward.9} parent=0 // pred_check
    %p16 = pneg %p15
  $region15: #{lenet5_forward.9} parent=0 // pred_check_branch
    %18 = sbr.rel (%p16) target = $region17
  $region16: #{lenet5_forward.9} parent=0 // pred_region
    %19 = vst [vmem:[#allocation2] sm:$0xff] -inf
    %20 = vst [vmem:[#allocation2 + $0x8] sm:$0xff] -inf
  $region17: #{lenet5_forward.9} parent=0 // pred_fallthru
    _
  %v21 = vld [vmem:[%s1] sm:$0xf]
  %v22 = vld [vmem:[%s1 + $0x4] sm:$0xf]
  %v23 = vld [vmem:[%s0] sm:$0xf]
  %v24 = vld [vmem:[%s0 + $0x4] sm:$0xf]
  %v25 = vld [vmem:[%s0 + $0x8] sm:$0xf]
  %v26 = vld [vmem:[%s0 + $0xc] sm:$0xf]
  %v27 = vld [vmem:[%s0 + $0x10] sm:$0xf]
  %v28 = vld [vmem:[%s0 + $0x14] sm:$0xf]
  %v29 = vld [vmem:[%s0 + $0x18] sm:$0xf]
  %v30 = vld [vmem:[%s0 + $0x1c] sm:$0xf]
  %v31 = vld [vmem:[%s0 + $0x20] sm:$0xf]
  %v32 = vld [vmem:[%s0 + $0x24] sm:$0xf]
  %v33 = vld [vmem:[%s0 + $0x28] sm:$0xf]
  %v34 = vld [vmem:[%s0 + $0x2c] sm:$0xf]
  %v37 = vunpack.c.l.b16 %v21
  %v38 = vunpack.c.l.b16 %v22
  %v39 = vpack.c.b16 %v38, %v37
  %v52 = vunpack.c.l.b16 %v23
  %v53 = vunpack.c.l.b16 %v24
  %v54 = vunpack.c.l.b16 %v25
  %v55 = vunpack.c.l.b16 %v26
  %v56 = vunpack.c.l.b16 %v27
  %v57 = vunpack.c.l.b16 %v28
  %v58 = vunpack.c.l.b16 %v29
  %v59 = vunpack.c.l.b16 %v30
  %v60 = vunpack.c.l.b16 %v31
  %v61 = vunpack.c.l.b16 %v32
  %v62 = vunpack.c.l.b16 %v33
  %v63 = vunpack.c.l.b16 %v34
  %v64 = vpack.c.b16 %v53, %v52
  %v65 = vpack.c.b16 %v55, %v54
  %v66 = vpack.c.b16 %v57, %v56
  %v67 = vpack.c.b16 %v59, %v58
  %v68 = vpack.c.b16 %v61, %v60
  %v69 = vpack.c.b16 %v63, %v62
  %vm76 = vcmask 785408
  %v78 = vsel %vm76, %v39, 0
  %80 = vmatpush.bf16.msra.mxu0 0
  %81 = vmatpush.bf16.msra.mxu0 0
  %82 = vmatpush.bf16.msra.mxu0 %v69
  %83 = vmatpush.bf16.msra.mxu0 %v68
  %84 = vmatpush.bf16.msra.mxu0 %v67
  %85 = vmatpush.bf16.msra.mxu0 %v66
  %86 = vmatpush.bf16.msra.mxu0 %v65
  %87 = vmatpush.bf16.msra.mxu0 %v64
  %88 = vmatmul.bf16.gmra.mxu0 %v78
  %v89 = vpop.f32.mrf.mxu0
  %v90 = vadd.f32 0.0, %v89
  %v91 = vpop.f32.mrf.mxu0
  %v92 = vadd.f32 0.0, %v91
  %93 = vdwg.mxu0
  %v94 = vld [vmem:[#allocation2] sm:$0xff]
  %v95 = vld [vmem:[#allocation2 + $0x8] sm:$0xff]
  %v96 = vmax.f32 %v94, %v90
  %v97 = vmax.f32 %v95, %v92
  %98 = vst [vmem:[#allocation2] sm:$0xff] %v96
  %99 = vst [vmem:[#allocation2 + $0x8] sm:$0xff] %v97
  // Predicated region
  $region18: #{lenet5_forward.9} parent=0 // pred_check
    %p100 = pneg %p15
  $region19: #{lenet5_forward.9} parent=0 // pred_check_branch
    %102 = sbr.rel (%p100) target = $region21
  $region20: #{lenet5_forward.9} parent=0 // pred_region
    %v103 = vld [vmem:[#allocation2] sm:$0xff]
    %v104 = vld [vmem:[#allocation2 + $0x8] sm:$0xff]
    %v105 = vld [vmem:[%s2] sm:$0xff]
    %v106 = vld [vmem:[%s2 + $0x8] sm:$0xff]
    %108 = vset.pattern.permute.xlu0 0
    %109 = vperm.xlu0 %108, %v105
    %v110 = vpop.permute.xlu0 %109
    %113 = vset.pattern.permute.xlu0 0
    %114 = vperm.xlu0 %113, %v106
    %v115 = vpop.permute.xlu0 %114
    %v117 = vadd.f32 %v103, %v110
    %v118 = vadd.f32 %v104, %v115
    %v119 = vtanh.pop %v117
    %v120 = vtanh.pop %v118
    %121 = vst [vmem:[%s3] sm:$0xff] %v119
    %122 = vst [vmem:[%s3 + $0x8] sm:$0xff] %v120
  $region21: #{lenet5_forward.9} parent=0 // pred_fallthru
    _
  // Predicated region
  $region22: #{lenet5_forward.9} parent=0 // pred_check
    _
  $region23: #{lenet5_forward.9} parent=0 // pred_check_branch
    %124 = sbr.rel (0) target = $region25
  $region24: #{lenet5_forward.9} parent=0 // pred_region
    _
  $region25: #{lenet5_forward.9} parent=0 // pred_fallthru
    _
  // Predicated region
  $region26: #{lenet5_forward.9} parent=0 // pred_check
    _
  $region27: #{lenet5_forward.9} parent=0 // pred_check_branch
    %126 = sbr.rel (0) target = $region29
  $region28: #{lenet5_forward.9} parent=0 // pred_region
    _
  $region29: #{lenet5_forward.9} parent=0 // pred_fallthru
    _

</llo_original>
